<compile_context>
chip_gen: v5e
topology: v5e:2x2
jax: 0.10.0
libtpu: 0.0.40
codegen_flags: <defaults>
</compile_context>

<pallas_src>
import functools

import numpy as np
import jax
import jax.numpy as jnp
from jax.experimental import pallas as pl
from jax.experimental.pallas import tpu as pltpu

_LANES = 128
_SUBLANES = 8


# --------------------------- VMEM budget / tiling --------------------------- #

def _vmem_budget():
    """(working-set budget, vmem_limit_bytes), generation-aware, safe fallback."""
    try:
        cap = int(pltpu.get_tpu_info().vmem_capacity_bytes)
    except Exception:
        cap = 64 * 1024 * 1024                      # v7x-safe fallback
    budget = min((cap * 5) // 8, 80 * 1024 * 1024)  # ~40 MiB v7x, ~80 MiB v5e/v6e
    limit = min(budget + (8 << 20), (cap * 3) // 4)
    return budget, limit


def _rows_for(n_elems):
    rows = -(-n_elems // _LANES)
    return ((rows + _SUBLANES - 1) // _SUBLANES) * _SUBLANES


def _pick_block(rows_p, n_refs, budget_bytes):
    """Largest multiple-of-8 divisor of rows_p fitting the double-buffered budget."""
    cap = budget_bytes // (2 * n_refs * _LANES * 4)
    cap = max(_SUBLANES, min(cap, rows_p))
    cap = (cap // _SUBLANES) * _SUBLANES
    for d in range(cap, _SUBLANES - 1, -_SUBLANES):
        if rows_p % d == 0:
            return d
    return _SUBLANES


# ------------------------------ Pallas kernels ------------------------------ #

def _dual_cmul_kernel(fr_ref, fi_ref, ar_ref, ai_ref, br_ref, bi_ref,
                      oar_ref, oai_ref, obr_ref, obi_ref):
    """Fused: f*otfA and f*otfB -- reads f (fft_fusion) from HBM only once."""
    f_r = fr_ref[...]
    f_i = fi_ref[...]
    a_r = ar_ref[...]
    a_i = ai_ref[...]
    oar_ref[...] = f_r * a_r - f_i * a_i
    oai_ref[...] = f_r * a_i + f_i * a_r
    b_r = br_ref[...]
    b_i = bi_ref[...]
    obr_ref[...] = f_r * b_r - f_i * b_i
    obi_ref[...] = f_r * b_i + f_i * b_r


def _dual_cmul2_kernel(xr_ref, xi_ref, yr_ref, yi_ref,
                       ar_ref, ai_ref, br_ref, bi_ref,
                       oar_ref, oai_ref, obr_ref, obi_ref):
    """Fused post-FFT pair: x*otfA and y*otfB in one pass."""
    x_r = xr_ref[...]
    x_i = xi_ref[...]
    a_r = ar_ref[...]
    a_i = ai_ref[...]
    oar_ref[...] = x_r * a_r - x_i * a_i
    oai_ref[...] = x_r * a_i + x_i * a_r
    y_r = yr_ref[...]
    y_i = yi_ref[...]
    b_r = br_ref[...]
    b_i = bi_ref[...]
    obr_ref[...] = y_r * b_r - y_i * b_i
    obi_ref[...] = y_r * b_i + y_i * b_r


def _dual_ratio_kernel(va_ref, ba_ref, vb_ref, bb_ref, oa_ref, ob_ref, *, eps):
    """Fused A/B ratio: out = clamp(view / (blur + 1e-5), min=eps)."""
    oa_ref[...] = jnp.maximum(va_ref[...] / (ba_ref[...] + jnp.float32(1e-5)),
                              jnp.float32(eps))
    ob_ref[...] = jnp.maximum(vb_ref[...] / (bb_ref[...] + jnp.float32(1e-5)),
                              jnp.float32(eps))


# ------------------------------ spec helpers -------------------------------- #

def _vol_spec(block):
    # (B, rows, 128) arrays; batch dim squeezed out of the kernel view.
    return pl.BlockSpec((None, block, _LANES), lambda i, b: (b, i, 0))


def _otf_spec(block):
    # (rows, 128) constants; block index ignores batch -> stays VMEM-resident
    # across the (innermost) batch grid axis.
    return pl.BlockSpec((block, _LANES), lambda i, b: (i, 0))


# ------------------------------ layout helpers ------------------------------ #

def _vol_to_rows(x, rows_p):
    """(B, Z, Y, X) -> (B, rows_p, 128) f32; pure reshape when no padding needed."""
    b = x.shape[0]
    xf = jnp.reshape(x.astype(jnp.float32), (b, -1))
    pad = rows_p * _LANES - xf.shape[1]
    if pad:
        xf = jnp.pad(xf, ((0, 0), (0, pad)))
    return jnp.reshape(xf, (b, rows_p, _LANES))


def _rows_to_vol(y, vol_elems, shape):
    b = shape[0]
    yf = jnp.reshape(y, (b, -1))
    if yf.shape[1] != vol_elems:
        yf = yf[:, :vol_elems]
    return jnp.reshape(yf, shape)


def _flat_otf_np(x, rows_p):
    xf = np.asarray(x, np.float32).reshape(-1)
    pad = rows_p * _LANES - xf.size
    if pad:
        xf = np.pad(xf, (0, pad))
    return jnp.asarray(xf.reshape(rows_p, _LANES))


# ------------------------------ Module port --------------------------------- #

def align(img, x1, y1, z1, pad_value=0.0):
    """Numpy mirror of the PyTorch Align() helper (center crop/pad)."""
    x2, y2, z2 = img.shape
    x_m, y_m, z_m = max(x1, x2), max(y1, y2), max(z1, z2)
    tmp = np.ones((x_m, y_m, z_m), np.float32) * pad_value
    x_o = round((x_m - x2) / 2)
    y_o = round((y_m - y2) / 2)
    z_o = round((z_m - z2) / 2)
    tmp[x_o:x2 + x_o, y_o:y2 + y_o, z_o:z2 + z_o] = img
    x_o = round((x_m - x1) / 2)
    y_o = round((y_m - y1) / 2)
    z_o = round((z_m - z1) / 2)
    return tmp[x_o:x1 + x_o, y_o:y1 + y_o, z_o:z1 + z_o]


def _ifftshift_phase(shape):
    """Frequency factor S with ifftshift(ifftn(Y)) == ifftn(Y * S) over `shape`.

    ifftshift rolls each axis by -(N//2); in frequency space that is multiplication
    by exp(+2j*pi*k*(N//2)/N) (== (-1)^k for even N). Exact for odd sizes too.
    """
    phase = np.ones(shape, np.complex64)
    for ax, n in enumerate(shape):
        k = np.arange(n, dtype=np.float64)
        p = np.exp(2j * np.pi * k * (n // 2) / n).astype(np.complex64)
        bshape = [1] * len(shape)
        bshape[ax] = n
        phase = phase * p.reshape(bshape)
    return phase


class RLDeconvPallas:
    """JAX/Pallas port of RL_Deconv.forward.

    psfA_raw / psfB_raw: synthetic 3D PSF stacks in (X, Y, Z) order, i.e.
    equivalent to `tifffile.imread(...).transpose(2, 1, 0)` in the original.
    """

    def __init__(self, psfA_raw, psfB_raw, X_dim, Y_dim, Z_dim,
                 de_size=19, eps=1e-5, batch_size=1):
        self.eps = float(eps)
        self.batch_size = int(batch_size)
        self.vol_shape = (self.batch_size, Z_dim, Y_dim, X_dim)
        self.vol_elems = Z_dim * Y_dim * X_dim
        self.rows_p = _rows_for(self.vol_elems)

        budget, self.vmem_limit = _vmem_budget()
        # Per-kernel block rows, sized by number of double-buffered VMEM streams.
        self.block_cmul1 = _pick_block(self.rows_p, 10, budget)  # 6 vol-ish + 4 OTF
        self.block_cmul2 = _pick_block(self.rows_p, 12, budget)  # 8 vol + 4 OTF
        self.block_ratio = _pick_block(self.rows_p, 6, budget)   # 6 vol

        # PSFs -> OTFs at crop size (Z, Y, X).
        psfA = np.transpose(align(psfA_raw, X_dim, Y_dim, Z_dim), (2, 1, 0)).astype(np.float64)
        psfB = np.transpose(align(psfB_raw, X_dim, Y_dim, Z_dim), (2, 1, 0)).astype(np.float64)
        psfA = psfA / psfA.sum()
        psfB = psfB / psfB.sum()
        otfA = np.fft.fftn(psfA).astype(np.complex64)   # (Z, Y, X), NOT batch-broadcast
        otfB = np.fft.fftn(psfB).astype(np.complex64)

        # Unshifted complex OTFs: kept only for the pure-JAX reference check.
        self.otfA_full = jnp.asarray(otfA)
        self.otfB_full = jnp.asarray(otfB)

        # Fold the (Z,Y,X) part of torch.fft.ifftshift into the OTFs ONCE at init,
        # and precompute the kernel-ready flattened real/imag f32 views ONCE.
        phase_zyx = _ifftshift_phase((Z_dim, Y_dim, X_dim))
        otfA_s = (otfA * phase_zyx).astype(np.complex64)
        otfB_s = (otfB * phase_zyx).astype(np.complex64)
        self.otfA_r = _flat_otf_np(otfA_s.real, self.rows_p)
        self.otfA_i = _flat_otf_np(otfA_s.imag, self.rows_p)
        self.otfB_r = _flat_otf_np(otfB_s.real, self.rows_p)
        self.otfB_i = _flat_otf_np(otfB_s.imag, self.rows_p)

        # Batch-axis part of the 4-D ifftshift (torch fftn/ifftshift act on ALL axes,
        # including batch): an exact per-batch-frequency complex scalar. Identity for
        # batch_size == 1, so it is skipped entirely in that (default) case.
        B = self.batch_size
        if B > 1:
            kb = np.arange(B, dtype=np.float64)
            pB = np.exp(2j * np.pi * kb * (B // 2) / B).astype(np.complex64)
            self.batch_phase = jnp.asarray(pB)
        else:
            self.batch_phase = None

        # Degradation PSFs (conv3d kernels) -- kept for parity with __init__.
        psfA_d = np.transpose(align(psfA_raw, de_size, de_size, de_size), (2, 1, 0))
        psfB_d = np.transpose(align(psfB_raw, de_size, de_size, de_size), (2, 1, 0))
        self.psfA = jnp.asarray(psfA_d / psfA_d.sum(),
                                jnp.float32).reshape(1, 1, de_size, de_size, de_size)
        self.psfB = jnp.asarray(psfB_d / psfB_d.sum(),
                                jnp.float32).reshape(1, 1, de_size, de_size, de_size)
        # TODO(synk): degradation() (conv3d 'same') is not part of forward(); not ported.

    # --------------------------- pallas launchers --------------------------- #

    def _compiler_params(self):
        return pltpu.CompilerParams(
            dimension_semantics=("parallel", "parallel"),
            vmem_limit_bytes=self.vmem_limit)

    def _cmul_fusion(self, f_r, f_i):
        B, rows_p, block = self.batch_size, self.rows_p, self.block_cmul1
        total = B * rows_p * _LANES
        cost = pl.CostEstimate(flops=int(12 * total), transcendentals=0,
                               bytes_accessed=int((6 * B + 4) * rows_p * _LANES * 4))
        out_sds = tuple(jax.ShapeDtypeStruct((B, rows_p, _LANES), jnp.float32)
                        for _ in range(4))
        return pl.pallas_call(
            _dual_cmul_kernel,
            out_shape=out_sds,
            grid=(rows_p // block, B),
            in_specs=[_vol_spec(block), _vol_spec(block),
                      _otf_spec(block), _otf_spec(block),
                      _otf_spec(block), _otf_spec(block)],
            out_specs=tuple(_vol_spec(block) for _ in range(4)),
            compiler_params=self._compiler_params(),
            cost_estimate=cost,
        )(f_r, f_i, self.otfA_r, self.otfA_i, self.otfB_r, self.otfB_i)

    def _cmul_pair(self, xr, xi, yr, yi):
        B, rows_p, block = self.batch_size, self.rows_p, self.block_cmul2
        total = B * rows_p * _LANES
        cost = pl.CostEstimate(flops=int(12 * total), transcendentals=0,
                               bytes_accessed=int((8 * B + 4) * rows_p * _LANES * 4))
        out_sds = tuple(jax.ShapeDtypeStruct((B, rows_p, _LANES), jnp.float32)
                        for _ in range(4))
        return pl.pallas_call(
            _dual_cmul2_kernel,
            out_shape=out_sds,
            grid=(rows_p // block, B),
            in_specs=[_vol_spec(block), _vol_spec(block),
                      _vol_spec(block), _vol_spec(block),
                      _otf_spec(block), _otf_spec(block),
                      _otf_spec(block), _otf_spec(block)],
            out_specs=tuple(_vol_spec(block) for _ in range(4)),
            compiler_params=self._compiler_params(),
            cost_estimate=cost,
        )(xr, xi, yr, yi, self.otfA_r, self.otfA_i, self.otfB_r, self.otfB_i)

    def _ratio(self, va, ba, vb, bb):
        B, rows_p, block = self.batch_size, self.rows_p, self.block_ratio
        total = B * rows_p * _LANES
        cost = pl.CostEstimate(flops=int(6 * total), transcendentals=0,
                               bytes_accessed=int(6 * B * rows_p * _LANES * 4))
        kern = functools.partial(_dual_ratio_kernel, eps=self.eps)
        out_sds = tuple(jax.ShapeDtypeStruct((B, rows_p, _LANES), jnp.float32)
                        for _ in range(2))
        return pl.pallas_call(
            kern,
            out_shape=out_sds,
            grid=(rows_p // block, B),
            in_specs=[_vol_spec(block)] * 4,
            out_specs=tuple(_vol_spec(block) for _ in range(2)),
            compiler_params=self._compiler_params(),
            cost_estimate=cost,
        )(va, ba, vb, bb)

    # ------------------------------- forward -------------------------------- #

    def __call__(self, viewA, viewB, fusion):
        rows_p, ne, shape = self.rows_p, self.vol_elems, self.vol_shape

        # torch.fft.fftn with no dims == FFT over ALL axes (incl. batch).
        fft_fusion = jnp.fft.fftn(fusion)
        if self.batch_phase is not None:   # batch part of ifftshift; exact, B>1 only
            fft_fusion = fft_fusion * self.batch_phase[:, None, None, None]
        f_r = _vol_to_rows(jnp.real(fft_fusion), rows_p)
        f_i = _vol_to_rows(jnp.imag(fft_fusion), rows_p)

        # Fused: fft_fusion*otfA and fft_fusion*otfB (ifftshift baked into OTFs).
        yar, yai, ybr, ybi = self._cmul_fusion(f_r, f_i)

        blurA = jnp.real(jnp.fft.ifftn(jax.lax.complex(
            _rows_to_vol(yar, ne, shape), _rows_to_vol(yai, ne, shape))))
        blurB = jnp.real(jnp.fft.ifftn(jax.lax.complex(
            _rows_to_vol(ybr, ne, shape), _rows_to_vol(ybi, ne, shape))))

        # Fused A/B ratio-clamp.
        curA2d, curB2d = self._ratio(
            _vol_to_rows(viewA, rows_p), _vol_to_rows(blurA, rows_p),
            _vol_to_rows(viewB, rows_p), _vol_to_rows(blurB, rows_p))
        curA = _rows_to_vol(curA2d, ne, shape)
        curB = _rows_to_vol(curB2d, ne, shape)

        fftA = jnp.fft.fftn(curA)
        fftB = jnp.fft.fftn(curB)
        if self.batch_phase is not None:
            fftA = fftA * self.batch_phase[:, None, None, None]
            fftB = fftB * self.batch_phase[:, None, None, None]

        # Fused: fftA*otfA and fftB*otfB.
        zar, zai, zbr, zbi = self._cmul_pair(
            _vol_to_rows(jnp.real(fftA), rows_p), _vol_to_rows(jnp.imag(fftA), rows_p),
            _vol_to_rows(jnp.real(fftB), rows_p), _vol_to_rows(jnp.imag(fftB), rows_p))

        curA = jnp.real(jnp.fft.ifftn(jax.lax.complex(
            _rows_to_vol(zar, ne, shape), _rows_to_vol(zai, ne, shape))))
        curB = jnp.real(jnp.fft.ifftn(jax.lax.complex(
            _rows_to_vol(zbr, ne, shape), _rows_to_vol(zbi, ne, shape))))
        return curA, curB

    # Pure-JAX mirror of the original torch forward (explicit ifftshift, no Pallas)
    # -- used only to validate the optimized path.
    def reference_forward(self, viewA, viewB, fusion):
        fft_fusion = jnp.fft.fftn(fusion)
        blur = jnp.real(jnp.fft.ifftshift(
            jnp.fft.ifftn(fft_fusion * self.otfA_full))) + 1e-5
        curA = jnp.maximum(viewA / blur, self.eps)
        curA = jnp.real(jnp.fft.ifftshift(
            jnp.fft.ifftn(jnp.fft.fftn(curA) * self.otfA_full)))
        blur = jnp.real(jnp.fft.ifftshift(
            jnp.fft.ifftn(fft_fusion * self.otfB_full))) + 1e-5
        curB = jnp.maximum(viewB / blur, self.eps)
        curB = jnp.real(jnp.fft.ifftshift(
            jnp.fft.ifftn(jnp.fft.fftn(curB) * self.otfB_full)))
        return curA, curB


# ---------------------------------- Demo ------------------------------------ #

if __name__ == "__main__":
    key = jax.random.PRNGKey(0)
    kA, kB, k1, k2, k3 = jax.random.split(key, 5)

    B, Z, Y, X = 2, 8, 16, 16  # (batch, Z_dim, Y_dim, X_dim); exercises the B>1 path

    # Deterministic synthetic PSF stacks in (X, Y, Z) order (positive values).
    psfA_raw = np.asarray(jax.random.uniform(kA, (7, 7, 7), jnp.float32)) + 0.1
    psfB_raw = np.asarray(jax.random.uniform(kB, (7, 7, 7), jnp.float32)) + 0.1

    model = RLDeconvPallas(psfA_raw, psfB_raw, X_dim=X, Y_dim=Y, Z_dim=Z,
                           de_size=7, eps=1e-5, batch_size=B)

    viewA = jax.random.uniform(k1, (B, Z, Y, X), jnp.float32) + 0.5
    viewB = jax.random.uniform(k2, (B, Z, Y, X), jnp.float32) + 0.5
    fusion = jax.random.uniform(k3, (B, Z, Y, X), jnp.float32) + 0.5

    fwd = jax.jit(model.__call__)
    curA, curB = fwd(viewA, viewB, fusion)
    jax.block_until_ready((curA, curB))

    # Validate against the straight (torch-semantics) JAX reference.
    refA, refB = model.reference_forward(viewA, viewB, fusion)
    np.testing.assert_allclose(np.asarray(curA), np.asarray(refA),
                               rtol=2e-3, atol=2e-3)
    np.testing.assert_allclose(np.asarray(curB), np.asarray(refB),
                               rtol=2e-3, atol=2e-3)

    assert curA.shape == (B, Z, Y, X) and curA.dtype == jnp.float32
    assert curB.shape == (B, Z, Y, X) and curB.dtype == jnp.float32
    assert bool(jnp.all(jnp.isfinite(curA))) and bool(jnp.all(jnp.isfinite(curB)))

    print("KERNEL_OK")
</pallas_src>

<mosaic_0001>
module attributes {stable_mosaic.version = 11 : i64} {
  func.func @_dual_cmul_kernel(%arg0: i32, %arg1: i32, %arg2: memref<1x16x128xf32, #tpu.memory_space<vmem>>, %arg3: memref<1x16x128xf32, #tpu.memory_space<vmem>>, %arg4: memref<16x128xf32, #tpu.memory_space<vmem>>, %arg5: memref<16x128xf32, #tpu.memory_space<vmem>>, %arg6: memref<16x128xf32, #tpu.memory_space<vmem>>, %arg7: memref<16x128xf32, #tpu.memory_space<vmem>>, %arg8: memref<1x16x128xf32, #tpu.memory_space<vmem>>, %arg9: memref<1x16x128xf32, #tpu.memory_space<vmem>>, %arg10: memref<1x16x128xf32, #tpu.memory_space<vmem>>, %arg11: memref<1x16x128xf32, #tpu.memory_space<vmem>>) attributes {dimension_semantics = [#tpu.dimension_semantics<parallel>, #tpu.dimension_semantics<parallel>], iteration_bounds = array<i64: 1, 2>, scalar_prefetch = 0 : i64, scratch_operands = 0 : i64, tpu.core_type = #tpu.core_type<tc>, window_params = [{transform_indices = @transform_0, window_bounds = array<i64: 1, 16, 128>}, {transform_indices = @transform_1, window_bounds = array<i64: 1, 16, 128>}, {transform_indices = @transform_2, window_bounds = array<i64: 16, 128>}, {transform_indices = @transform_3, window_bounds = array<i64: 16, 128>}, {transform_indices = @transform_4, window_bounds = array<i64: 16, 128>}, {transform_indices = @transform_5, window_bounds = array<i64: 16, 128>}, {transform_indices = @transform_6, window_bounds = array<i64: 1, 16, 128>}, {transform_indices = @transform_7, window_bounds = array<i64: 1, 16, 128>}, {transform_indices = @transform_8, window_bounds = array<i64: 1, 16, 128>}, {transform_indices = @transform_9, window_bounds = array<i64: 1, 16, 128>}]} {
    %c0 = arith.constant 0 : index
    %c0_0 = arith.constant 0 : index
    %c0_1 = arith.constant 0 : index
    %0 = vector.load %arg2[%c0, %c0_0, %c0_1] : memref<1x16x128xf32, #tpu.memory_space<vmem>>, vector<1x16x128xf32>
    %1 = vector.shape_cast %0 : vector<1x16x128xf32> to vector<16x128xf32>
    %c0_2 = arith.constant 0 : index
    %c0_3 = arith.constant 0 : index
    %c0_4 = arith.constant 0 : index
    %2 = vector.load %arg3[%c0_2, %c0_3, %c0_4] : memref<1x16x128xf32, #tpu.memory_space<vmem>>, vector<1x16x128xf32>
    %3 = vector.shape_cast %2 : vector<1x16x128xf32> to vector<16x128xf32>
    %c0_5 = arith.constant 0 : index
    %c0_6 = arith.constant 0 : index
    %4 = vector.load %arg4[%c0_5, %c0_6] : memref<16x128xf32, #tpu.memory_space<vmem>>, vector<16x128xf32>
    %c0_7 = arith.constant 0 : index
    %c0_8 = arith.constant 0 : index
    %5 = vector.load %arg5[%c0_7, %c0_8] : memref<16x128xf32, #tpu.memory_space<vmem>>, vector<16x128xf32>
    %6 = arith.mulf %1, %4 : vector<16x128xf32>
    %7 = arith.mulf %3, %5 : vector<16x128xf32>
    %8 = arith.subf %6, %7 : vector<16x128xf32>
    %c0_9 = arith.constant 0 : index
    %c0_10 = arith.constant 0 : index
    %c0_11 = arith.constant 0 : index
    %9 = vector.load %arg8[%c0_9, %c0_10, %c0_11] : memref<1x16x128xf32, #tpu.memory_space<vmem>>, vector<1x16x128xf32>
    %10 = vector.shape_cast %9 : vector<1x16x128xf32> to vector<16x128xf32>
    %11 = vector.shape_cast %8 : vector<16x128xf32> to vector<1x16x128xf32>
    tpu.vector_store %arg8[%c0_9, %c0_10, %c0_11], %11 {strides = array<i32>} : memref<1x16x128xf32, #tpu.memory_space<vmem>>, vector<1x16x128xf32>,
    %12 = arith.mulf %1, %5 : vector<16x128xf32>
    %13 = arith.mulf %3, %4 : vector<16x128xf32>
    %14 = arith.addf %12, %13 : vector<16x128xf32>
    %c0_12 = arith.constant 0 : index
    %c0_13 = arith.constant 0 : index
    %c0_14 = arith.constant 0 : index
    %15 = vector.load %arg9[%c0_12, %c0_13, %c0_14] : memref<1x16x128xf32, #tpu.memory_space<vmem>>, vector<1x16x128xf32>
    %16 = vector.shape_cast %15 : vector<1x16x128xf32> to vector<16x128xf32>
    %17 = vector.shape_cast %14 : vector<16x128xf32> to vector<1x16x128xf32>
    tpu.vector_store %arg9[%c0_12, %c0_13, %c0_14], %17 {strides = array<i32>} : memref<1x16x128xf32, #tpu.memory_space<vmem>>, vector<1x16x128xf32>,
    %c0_15 = arith.constant 0 : index
    %c0_16 = arith.constant 0 : index
    %18 = vector.load %arg6[%c0_15, %c0_16] : memref<16x128xf32, #tpu.memory_space<vmem>>, vector<16x128xf32>
    %c0_17 = arith.constant 0 : index
    %c0_18 = arith.constant 0 : index
    %19 = vector.load %arg7[%c0_17, %c0_18] : memref<16x128xf32, #tpu.memory_space<vmem>>, vector<16x128xf32>
    %20 = arith.mulf %1, %18 : vector<16x128xf32>
    %21 = arith.mulf %3, %19 : vector<16x128xf32>
    %22 = arith.subf %20, %21 : vector<16x128xf32>
    %c0_19 = arith.constant 0 : index
    %c0_20 = arith.constant 0 : index
    %c0_21 = arith.constant 0 : index
    %23 = vector.load %arg10[%c0_19, %c0_20, %c0_21] : memref<1x16x128xf32, #tpu.memory_space<vmem>>, vector<1x16x128xf32>
    %24 = vector.shape_cast %23 : vector<1x16x128xf32> to vector<16x128xf32>
    %25 = vector.shape_cast %22 : vector<16x128xf32> to vector<1x16x128xf32>
    tpu.vector_store %arg10[%c0_19, %c0_20, %c0_21], %25 {strides = array<i32>} : memref<1x16x128xf32, #tpu.memory_space<vmem>>, vector<1x16x128xf32>,
    %26 = arith.mulf %1, %19 : vector<16x128xf32>
    %27 = arith.mulf %3, %18 : vector<16x128xf32>
    %28 = arith.addf %26, %27 : vector<16x128xf32>
    %c0_22 = arith.constant 0 : index
    %c0_23 = arith.constant 0 : index
    %c0_24 = arith.constant 0 : index
    %29 = vector.load %arg11[%c0_22, %c0_23, %c0_24] : memref<1x16x128xf32, #tpu.memory_space<vmem>>, vector<1x16x128xf32>
    %30 = vector.shape_cast %29 : vector<1x16x128xf32> to vector<16x128xf32>
    %31 = vector.shape_cast %28 : vector<16x128xf32> to vector<1x16x128xf32>
    tpu.vector_store %arg11[%c0_22, %c0_23, %c0_24], %31 {strides = array<i32>} : memref<1x16x128xf32, #tpu.memory_space<vmem>>, vector<1x16x128xf32>,
    return
  }
  func.func @transform_0(%arg0: i32, %arg1: i32) -> (i32, i32, i32) {
    %c0_i32 = arith.constant 0 : i32
    %c0_i32_0 = arith.constant 0 : i32
    return %arg1, %arg0, %c0_i32 : i32, i32, i32
  }
  func.func @transform_1(%arg0: i32, %arg1: i32) -> (i32, i32, i32) {
    %c0_i32 = arith.constant 0 : i32
    %c0_i32_0 = arith.constant 0 : i32
    return %arg1, %arg0, %c0_i32 : i32, i32, i32
  }
  func.func @transform_2(%arg0: i32, %arg1: i32) -> (i32, i32) {
    %c0_i32 = arith.constant 0 : i32
    %c0_i32_0 = arith.constant 0 : i32
    return %arg0, %c0_i32 : i32, i32
  }
  func.func @transform_3(%arg0: i32, %arg1: i32) -> (i32, i32) {
    %c0_i32 = arith.constant 0 : i32
    %c0_i32_0 = arith.constant 0 : i32
    return %arg0, %c0_i32 : i32, i32
  }
  func.func @transform_4(%arg0: i32, %arg1: i32) -> (i32, i32) {
    %c0_i32 = arith.constant 0 : i32
    %c0_i32_0 = arith.constant 0 : i32
    return %arg0, %c0_i32 : i32, i32
  }
  func.func @transform_5(%arg0: i32, %arg1: i32) -> (i32, i32) {
    %c0_i32 = arith.constant 0 : i32
    %c0_i32_0 = arith.constant 0 : i32
    return %arg0, %c0_i32 : i32, i32
  }
  func.func @transform_6(%arg0: i32, %arg1: i32) -> (i32, i32, i32) {
    %c0_i32 = arith.constant 0 : i32
    %c0_i32_0 = arith.constant 0 : i32
    return %arg1, %arg0, %c0_i32 : i32, i32, i32
  }
  func.func @transform_7(%arg0: i32, %arg1: i32) -> (i32, i32, i32) {
    %c0_i32 = arith.constant 0 : i32
    %c0_i32_0 = arith.constant 0 : i32
    return %arg1, %arg0, %c0_i32 : i32, i32, i32
  }
  func.func @transform_8(%arg0: i32, %arg1: i32) -> (i32, i32, i32) {
    %c0_i32 = arith.constant 0 : i32
    %c0_i32_0 = arith.constant 0 : i32
    return %arg1, %arg0, %c0_i32 : i32, i32, i32
  }
  func.func @transform_9(%arg0: i32, %arg1: i32) -> (i32, i32, i32) {
    %c0_i32 = arith.constant 0 : i32
    %c0_i32_0 = arith.constant 0 : i32
    return %arg1, %arg0, %c0_i32 : i32, i32, i32
  }
}

module attributes {stable_mosaic.version = 11 : i64} {
  func.func @_dual_ratio_kernel(%arg0: i32, %arg1: i32, %arg2: memref<1x16x128xf32, #tpu.memory_space<vmem>>, %arg3: memref<1x16x128xf32, #tpu.memory_space<vmem>>, %arg4: memref<1x16x128xf32, #tpu.memory_space<vmem>>, %arg5: memref<1x16x128xf32, #tpu.memory_space<vmem>>, %arg6: memref<1x16x128xf32, #tpu.memory_space<vmem>>, %arg7: memref<1x16x128xf32, #tpu.memory_space<vmem>>) attributes {dimension_semantics = [#tpu.dimension_semantics<parallel>, #tpu.dimension_semantics<parallel>], iteration_bounds = array<i64: 1, 2>, scalar_prefetch = 0 : i64, scratch_operands = 0 : i64, tpu.core_type = #tpu.core_type<tc>, window_params = [{transform_indices = @transform_0, window_bounds = array<i64: 1, 16, 128>}, {transform_indices = @transform_1, window_bounds = array<i64: 1, 16, 128>}, {transform_indices = @transform_2, window_bounds = array<i64: 1, 16, 128>}, {transform_indices = @transform_3, window_bounds = array<i64: 1, 16, 128>}, {transform_indices = @transform_4, window_bounds = array<i64: 1, 16, 128>}, {transform_indices = @transform_5, window_bounds = array<i64: 1, 16, 128>}]} {
    %c0 = arith.constant 0 : index
    %c0_0 = arith.constant 0 : index
    %c0_1 = arith.constant 0 : index
    %0 = vector.load %arg2[%c0, %c0_0, %c0_1] : memref<1x16x128xf32, #tpu.memory_space<vmem>>, vector<1x16x128xf32>
    %1 = vector.shape_cast %0 : vector<1x16x128xf32> to vector<16x128xf32>
    %c0_2 = arith.constant 0 : index
    %c0_3 = arith.constant 0 : index
    %c0_4 = arith.constant 0 : index
    %2 = vector.load %arg3[%c0_2, %c0_3, %c0_4] : memref<1x16x128xf32, #tpu.memory_space<vmem>>, vector<1x16x128xf32>
    %3 = vector.shape_cast %2 : vector<1x16x128xf32> to vector<16x128xf32>
    %cst = arith.constant 9.99999974E-6 : f32
    %4 = vector.broadcast %cst : f32 to vector<16x128xf32>
    %5 = arith.addf %3, %4 : vector<16x128xf32>
    %6 = arith.divf %1, %5 : vector<16x128xf32>
    %cst_5 = arith.constant 9.99999974E-6 : f32
    %7 = vector.broadcast %cst_5 : f32 to vector<16x128xf32>
    %8 = arith.maximumf %6, %7 : vector<16x128xf32>
    %c0_6 = arith.constant 0 : index
    %c0_7 = arith.constant 0 : index
    %c0_8 = arith.constant 0 : index
    %9 = vector.load %arg6[%c0_6, %c0_7, %c0_8] : memref<1x16x128xf32, #tpu.memory_space<vmem>>, vector<1x16x128xf32>
    %10 = vector.shape_cast %9 : vector<1x16x128xf32> to vector<16x128xf32>
    %11 = vector.shape_cast %8 : vector<16x128xf32> to vector<1x16x128xf32>
    tpu.vector_store %arg6[%c0_6, %c0_7, %c0_8], %11 {strides = array<i32>} : memref<1x16x128xf32, #tpu.memory_space<vmem>>, vector<1x16x128xf32>,
    %c0_9 = arith.constant 0 : index
    %c0_10 = arith.constant 0 : index
    %c0_11 = arith.constant 0 : index
    %12 = vector.load %arg4[%c0_9, %c0_10, %c0_11] : memref<1x16x128xf32, #tpu.memory_space<vmem>>, vector<1x16x128xf32>
    %13 = vector.shape_cast %12 : vector<1x16x128xf32> to vector<16x128xf32>
    %c0_12 = arith.constant 0 : index
    %c0_13 = arith.constant 0 : index
    %c0_14 = arith.constant 0 : index
    %14 = vector.load %arg5[%c0_12, %c0_13, %c0_14] : memref<1x16x128xf32, #tpu.memory_space<vmem>>, vector<1x16x128xf32>
    %15 = vector.shape_cast %14 : vector<1x16x128xf32> to vector<16x128xf32>
    %cst_15 = arith.constant 9.99999974E-6 : f32
    %16 = vector.broadcast %cst_15 : f32 to vector<16x128xf32>
    %17 = arith.addf %15, %16 : vector<16x128xf32>
    %18 = arith.divf %13, %17 : vector<16x128xf32>
    %cst_16 = arith.constant 9.99999974E-6 : f32
    %19 = vector.broadcast %cst_16 : f32 to vector<16x128xf32>
    %20 = arith.maximumf %18, %19 : vector<16x128xf32>
    %c0_17 = arith.constant 0 : index
    %c0_18 = arith.constant 0 : index
    %c0_19 = arith.constant 0 : index
    %21 = vector.load %arg7[%c0_17, %c0_18, %c0_19] : memref<1x16x128xf32, #tpu.memory_space<vmem>>, vector<1x16x128xf32>
    %22 = vector.shape_cast %21 : vector<1x16x128xf32> to vector<16x128xf32>
    %23 = vector.shape_cast %20 : vector<16x128xf32> to vector<1x16x128xf32>
    tpu.vector_store %arg7[%c0_17, %c0_18, %c0_19], %23 {strides = array<i32>} : memref<1x16x128xf32, #tpu.memory_space<vmem>>, vector<1x16x128xf32>,
    return
  }
  func.func @transform_0(%arg0: i32, %arg1: i32) -> (i32, i32, i32) {
    %c0_i32 = arith.constant 0 : i32
    %c0_i32_0 = arith.constant 0 : i32
    return %arg1, %arg0, %c0_i32 : i32, i32, i32
  }
  func.func @transform_1(%arg0: i32, %arg1: i32) -> (i32, i32, i32) {
    %c0_i32 = arith.constant 0 : i32
    %c0_i32_0 = arith.constant 0 : i32
    return %arg1, %arg0, %c0_i32 : i32, i32, i32
  }
  func.func @transform_2(%arg0: i32, %arg1: i32) -> (i32, i32, i32) {
    %c0_i32 = arith.constant 0 : i32
    %c0_i32_0 = arith.constant 0 : i32
    return %arg1, %arg0, %c0_i32 : i32, i32, i32
  }
  func.func @transform_3(%arg0: i32, %arg1: i32) -> (i32, i32, i32) {
    %c0_i32 = arith.constant 0 : i32
    %c0_i32_0 = arith.constant 0 : i32
    return %arg1, %arg0, %c0_i32 : i32, i32, i32
  }
  func.func @transform_4(%arg0: i32, %arg1: i32) -> (i32, i32, i32) {
    %c0_i32 = arith.constant 0 : i32
    %c0_i32_0 = arith.constant 0 : i32
    return %arg1, %arg0, %c0_i32 : i32, i32, i32
  }
  func.func @transform_5(%arg0: i32, %arg1: i32) -> (i32, i32, i32) {
    %c0_i32 = arith.constant 0 : i32
    %c0_i32_0 = arith.constant 0 : i32
    return %arg1, %arg0, %c0_i32 : i32, i32, i32
  }
}

module attributes {stable_mosaic.version = 11 : i64} {
  func.func @_dual_cmul2_kernel(%arg0: i32, %arg1: i32, %arg2: memref<1x16x128xf32, #tpu.memory_space<vmem>>, %arg3: memref<1x16x128xf32, #tpu.memory_space<vmem>>, %arg4: memref<1x16x128xf32, #tpu.memory_space<vmem>>, %arg5: memref<1x16x128xf32, #tpu.memory_space<vmem>>, %arg6: memref<16x128xf32, #tpu.memory_space<vmem>>, %arg7: memref<16x128xf32, #tpu.memory_space<vmem>>, %arg8: memref<16x128xf32, #tpu.memory_space<vmem>>, %arg9: memref<16x128xf32, #tpu.memory_space<vmem>>, %arg10: memref<1x16x128xf32, #tpu.memory_space<vmem>>, %arg11: memref<1x16x128xf32, #tpu.memory_space<vmem>>, %arg12: memref<1x16x128xf32, #tpu.memory_space<vmem>>, %arg13: memref<1x16x128xf32, #tpu.memory_space<vmem>>) attributes {dimension_semantics = [#tpu.dimension_semantics<parallel>, #tpu.dimension_semantics<parallel>], iteration_bounds = array<i64: 1, 2>, scalar_prefetch = 0 : i64, scratch_operands = 0 : i64, tpu.core_type = #tpu.core_type<tc>, window_params = [{transform_indices = @transform_0, window_bounds = array<i64: 1, 16, 128>}, {transform_indices = @transform_1, window_bounds = array<i64: 1, 16, 128>}, {transform_indices = @transform_2, window_bounds = array<i64: 1, 16, 128>}, {transform_indices = @transform_3, window_bounds = array<i64: 1, 16, 128>}, {transform_indices = @transform_4, window_bounds = array<i64: 16, 128>}, {transform_indices = @transform_5, window_bounds = array<i64: 16, 128>}, {transform_indices = @transform_6, window_bounds = array<i64: 16, 128>}, {transform_indices = @transform_7, window_bounds = array<i64: 16, 128>}, {transform_indices = @transform_8, window_bounds = array<i64: 1, 16, 128>}, {transform_indices = @transform_9, window_bounds = array<i64: 1, 16, 128>}, {transform_indices = @transform_10, window_bounds = array<i64: 1, 16, 128>}, {transform_indices = @transform_11, window_bounds = array<i64: 1, 16, 128>}]} {
    %c0 = arith.constant 0 : index
    %c0_0 = arith.constant 0 : index
    %c0_1 = arith.constant 0 : index
    %0 = vector.load %arg2[%c0, %c0_0, %c0_1] : memref<1x16x128xf32, #tpu.memory_space<vmem>>, vector<1x16x128xf32>
    %1 = vector.shape_cast %0 : vector<1x16x128xf32> to vector<16x128xf32>
    %c0_2 = arith.constant 0 : index
    %c0_3 = arith.constant 0 : index
    %c0_4 = arith.constant 0 : index
    %2 = vector.load %arg3[%c0_2, %c0_3, %c0_4] : memref<1x16x128xf32, #tpu.memory_space<vmem>>, vector<1x16x128xf32>
    %3 = vector.shape_cast %2 : vector<1x16x128xf32> to vector<16x128xf32>
    %c0_5 = arith.constant 0 : index
    %c0_6 = arith.constant 0 : index
    %4 = vector.load %arg6[%c0_5, %c0_6] : memref<16x128xf32, #tpu.memory_space<vmem>>, vector<16x128xf32>
    %c0_7 = arith.constant 0 : index
    %c0_8 = arith.constant 0 : index
    %5 = vector.load %arg7[%c0_7, %c0_8] : memref<16x128xf32, #tpu.memory_space<vmem>>, vector<16x128xf32>
    %6 = arith.mulf %1, %4 : vector<16x128xf32>
    %7 = arith.mulf %3, %5 : vector<16x128xf32>
    %8 = arith.subf %6, %7 : vector<16x128xf32>
    %c0_9 = arith.constant 0 : index
    %c0_10 = arith.constant 0 : index
    %c0_11 = arith.constant 0 : index
    %9 = vector.load %arg10[%c0_9, %c0_10, %c0_11] : memref<1x16x128xf32, #tpu.memory_space<vmem>>, vector<1x16x128xf32>
    %10 = vector.shape_cast %9 : vector<1x16x128xf32> to vector<16x128xf32>
    %11 = vector.shape_cast %8 : vector<16x128xf32> to vector<1x16x128xf32>
    tpu.vector_store %arg10[%c0_9, %c0_10, %c0_11], %11 {strides = array<i32>} : memref<1x16x128xf32, #tpu.memory_space<vmem>>, vector<1x16x128xf32>,
    %12 = arith.mulf %1, %5 : vector<16x128xf32>
    %13 = arith.mulf %3, %4 : vector<16x128xf32>
    %14 = arith.addf %12, %13 : vector<16x128xf32>
    %c0_12 = arith.constant 0 : index
    %c0_13 = arith.constant 0 : index
    %c0_14 = arith.constant 0 : index
    %15 = vector.load %arg11[%c0_12, %c0_13, %c0_14] : memref<1x16x128xf32, #tpu.memory_space<vmem>>, vector<1x16x128xf32>
    %16 = vector.shape_cast %15 : vector<1x16x128xf32> to vector<16x128xf32>
    %17 = vector.shape_cast %14 : vector<16x128xf32> to vector<1x16x128xf32>
    tpu.vector_store %arg11[%c0_12, %c0_13, %c0_14], %17 {strides = array<i32>} : memref<1x16x128xf32, #tpu.memory_space<vmem>>, vector<1x16x128xf32>,
    %c0_15 = arith.constant 0 : index
    %c0_16 = arith.constant 0 : index
    %c0_17 = arith.constant 0 : index
    %18 = vector.load %arg4[%c0_15, %c0_16, %c0_17] : memref<1x16x128xf32, #tpu.memory_space<vmem>>, vector<1x16x128xf32>
    %19 = vector.shape_cast %18 : vector<1x16x128xf32> to vector<16x128xf32>
    %c0_18 = arith.constant 0 : index
    %c0_19 = arith.constant 0 : index
    %c0_20 = arith.constant 0 : index
    %20 = vector.load %arg5[%c0_18, %c0_19, %c0_20] : memref<1x16x128xf32, #tpu.memory_space<vmem>>, vector<1x16x128xf32>
    %21 = vector.shape_cast %20 : vector<1x16x128xf32> to vector<16x128xf32>
    %c0_21 = arith.constant 0 : index
    %c0_22 = arith.constant 0 : index
    %22 = vector.load %arg8[%c0_21, %c0_22] : memref<16x128xf32, #tpu.memory_space<vmem>>, vector<16x128xf32>
    %c0_23 = arith.constant 0 : index
    %c0_24 = arith.constant 0 : index
    %23 = vector.load %arg9[%c0_23, %c0_24] : memref<16x128xf32, #tpu.memory_space<vmem>>, vector<16x128xf32>
    %24 = arith.mulf %19, %22 : vector<16x128xf32>
    %25 = arith.mulf %21, %23 : vector<16x128xf32>
    %26 = arith.subf %24, %25 : vector<16x128xf32>
    %c0_25 = arith.constant 0 : index
    %c0_26 = arith.constant 0 : index
    %c0_27 = arith.constant 0 : index
    %27 = vector.load %arg12[%c0_25, %c0_26, %c0_27] : memref<1x16x128xf32, #tpu.memory_space<vmem>>, vector<1x16x128xf32>
    %28 = vector.shape_cast %27 : vector<1x16x128xf32> to vector<16x128xf32>
    %29 = vector.shape_cast %26 : vector<16x128xf32> to vector<1x16x128xf32>
    tpu.vector_store %arg12[%c0_25, %c0_26, %c0_27], %29 {strides = array<i32>} : memref<1x16x128xf32, #tpu.memory_space<vmem>>, vector<1x16x128xf32>,
    %30 = arith.mulf %19, %23 : vector<16x128xf32>
    %31 = arith.mulf %21, %22 : vector<16x128xf32>
    %32 = arith.addf %30, %31 : vector<16x128xf32>
    %c0_28 = arith.constant 0 : index
    %c0_29 = arith.constant 0 : index
    %c0_30 = arith.constant 0 : index
    %33 = vector.load %arg13[%c0_28, %c0_29, %c0_30] : memref<1x16x128xf32, #tpu.memory_space<vmem>>, vector<1x16x128xf32>
    %34 = vector.shape_cast %33 : vector<1x16x128xf32> to vector<16x128xf32>
    %35 = vector.shape_cast %32 : vector<16x128xf32> to vector<1x16x128xf32>
    tpu.vector_store %arg13[%c0_28, %c0_29, %c0_30], %35 {strides = array<i32>} : memref<1x16x128xf32, #tpu.memory_space<vmem>>, vector<1x16x128xf32>,
    return
  }
  func.func @transform_0(%arg0: i32, %arg1: i32) -> (i32, i32, i32) {
    %c0_i32 = arith.constant 0 : i32
    %c0_i32_0 = arith.constant 0 : i32
    return %arg1, %arg0, %c0_i32 : i32, i32, i32
  }
  func.func @transform_1(%arg0: i32, %arg1: i32) -> (i32, i32, i32) {
    %c0_i32 = arith.constant 0 : i32
    %c0_i32_0 = arith.constant 0 : i32
    return %arg1, %arg0, %c0_i32 : i32, i32, i32
  }
  func.func @transform_2(%arg0: i32, %arg1: i32) -> (i32, i32, i32) {
    %c0_i32 = arith.constant 0 : i32
    %c0_i32_0 = arith.constant 0 : i32
    return %arg1, %arg0, %c0_i32 : i32, i32, i32
  }
  func.func @transform_3(%arg0: i32, %arg1: i32) -> (i32, i32, i32) {
    %c0_i32 = arith.constant 0 : i32
    %c0_i32_0 = arith.constant 0 : i32
    return %arg1, %arg0, %c0_i32 : i32, i32, i32
  }
  func.func @transform_4(%arg0: i32, %arg1: i32) -> (i32, i32) {
    %c0_i32 = arith.constant 0 : i32
    %c0_i32_0 = arith.constant 0 : i32
    return %arg0, %c0_i32 : i32, i32
  }
  func.func @transform_5(%arg0: i32, %arg1: i32) -> (i32, i32) {
    %c0_i32 = arith.constant 0 : i32
    %c0_i32_0 = arith.constant 0 : i32
    return %arg0, %c0_i32 : i32, i32
  }
  func.func @transform_6(%arg0: i32, %arg1: i32) -> (i32, i32) {
    %c0_i32 = arith.constant 0 : i32
    %c0_i32_0 = arith.constant 0 : i32
    return %arg0, %c0_i32 : i32, i32
  }
  func.func @transform_7(%arg0: i32, %arg1: i32) -> (i32, i32) {
    %c0_i32 = arith.constant 0 : i32
    %c0_i32_0 = arith.constant 0 : i32
    return %arg0, %c0_i32 : i32, i32
  }
  func.func @transform_8(%arg0: i32, %arg1: i32) -> (i32, i32, i32) {
    %c0_i32 = arith.constant 0 : i32
    %c0_i32_0 = arith.constant 0 : i32
    return %arg1, %arg0, %c0_i32 : i32, i32, i32
  }
  func.func @transform_9(%arg0: i32, %arg1: i32) -> (i32, i32, i32) {
    %c0_i32 = arith.constant 0 : i32
    %c0_i32_0 = arith.constant 0 : i32
    return %arg1, %arg0, %c0_i32 : i32, i32, i32
  }
  func.func @transform_10(%arg0: i32, %arg1: i32) -> (i32, i32, i32) {
    %c0_i32 = arith.constant 0 : i32
    %c0_i32_0 = arith.constant 0 : i32
    return %arg1, %arg0, %c0_i32 : i32, i32, i32
  }
  func.func @transform_11(%arg0: i32, %arg1: i32) -> (i32, i32, i32) {
    %c0_i32 = arith.constant 0 : i32
    %c0_i32_0 = arith.constant 0 : i32
    return %arg1, %arg0, %c0_i32 : i32, i32, i32
  }
}

</mosaic_0001>

<llo_original>
// kernel: a_call__.3
$region0: #{a_call__.3}
  #allocation0 [shape = 'u32[]', space=smem, size = 0x4, offset = 0x4, fixed_abs, tag = 'smem constant byte address 0x4 - core index']
  #allocation1 [shape = 'u32[72,128]{1,0:T(1,128)}', space=vmem, size = 0x9000, scoped, tag = 'internal scratch']
  %s0 = inlined_call_operand.vmem [shape: f32[2,16,128], index: 0, kind: input, shape index: {}]
  %s1 = inlined_call_operand.vmem [shape: f32[2,16,128], index: 1, kind: input, shape index: {}]
  %s2 = inlined_call_operand.vmem [shape: f32[16,128], index: 2, kind: input, shape index: {}]
  %s3 = inlined_call_operand.vmem [shape: f32[16,128], index: 3, kind: input, shape index: {}]
  %s4 = inlined_call_operand.vmem [shape: f32[16,128], index: 4, kind: input, shape index: {}]
  %s5 = inlined_call_operand.vmem [shape: f32[16,128], index: 5, kind: input, shape index: {}]
  %s6 = inlined_call_operand.vmem [shape: f32[2,16,128], index: 6, kind: output, shape index: {0}]
  %s7 = inlined_call_operand.vmem [shape: f32[2,16,128], index: 7, kind: output, shape index: {1}]
  %s8 = inlined_call_operand.vmem [shape: f32[2,16,128], index: 8, kind: output, shape index: {2}]
  %s9 = inlined_call_operand.vmem [shape: f32[2,16,128], index: 9, kind: output, shape index: {3}]
  %10 = xla_tuple %s6, %s7, %s8, %s9
  %s11 = sld [smem:[#allocation0]]
  $region81: #{a_call__.3} parent=0
    _
  %s13 = ssub.s32 1, %s11
  %s14 = scalar_select 0, %s13, %s11
  loop: start=0, step=1, limit=4
  $region2: #{a_call__.3} parent=0 // loop_pre_header
    _
  $region3: #{a_call__.3} parent=0 // loop_header
    %s16 = sphi 0, %s20
    %p17 = scmp.ge.s32.totalorder %s16, 4
    %s23 = sphi 0, %s35
    %s24 = sphi 0, %s31
    %s25 = sphi 0, %s23
    %s26 = sphi 0, %s24
    %s27 = sphi 0, %s25
    %s28 = sphi 0, %s26
    %s40 = sphi 0, %s42
    %s43 = sphi 0, %s40
    %s44 = sphi 0, %s43
    %s60 = sphi 0, %s44
    %s68 = sphi 0, %s70
    %s71 = sphi 0, %s68
    %s72 = sphi 0, %s71
    %s88 = sphi 0, %s72
    %s94 = sphi 0, %s96
    %s97 = sphi 0, %s94
    %s98 = sphi 0, %s97
    %s114 = sphi 0, %s98
    %s120 = sphi 0, %s122
    %s123 = sphi 0, %s120
    %s124 = sphi 0, %s123
    %s140 = sphi 0, %s124
    %s146 = sphi 0, %s148
    %s149 = sphi 0, %s146
    %s150 = sphi 0, %s149
    %s166 = sphi 0, %s150
    %s172 = sphi 0, %s174
    %s175 = sphi 0, %s172
    %s176 = sphi 0, %s175
    %s192 = sphi 0, %s176
    %s200 = sphi 0, %s202
    %s203 = sphi 0, %s200
    %s204 = sphi 0, %s203
    %s220 = sphi 0, %s204
    %s228 = sphi 0, %s230
    %s231 = sphi 0, %s228
    %s232 = sphi 0, %s231
    %s248 = sphi 0, %s232
    %s256 = sphi 0, %s258
    %s259 = sphi 0, %s256
    %s260 = sphi 0, %s259
    %s276 = sphi 0, %s260
    %s284 = sphi 0, %s286
    %s287 = sphi 0, %s284
    %s288 = sphi 0, %s287
    %s304 = sphi 0, %s288
  $region4: #{a_call__.3} parent=0 // loop_header_branch
    %19 = sbr.rel (%p17) target = $region8
  $region5: #{a_call__.3} parent=0 // loop_body
    %s21 = ssub.s32 %s16, 1
    %s22 = ssub.s32 %s16, 2
    %s29 = sadd.s32 1, %s24
    %p30 = scmp.ge.s32.totalorder %s29, 2
    %s31 = scalar_select %p30, 0, %s29
    %s32 = sadd.s32 1, %s23
    %s33 = scalar_select %p30, %s32, %s23
    %p34 = scmp.ge.s32.totalorder %s33, 1
    %s35 = scalar_select %p34, 0, %s33
    %s36 = ssub.s32 %s24, %s31
    %s37 = ssub.s32 %s23, %s35
    %s38 = sor.u32 %s36, %s37
    %p39 = scmp.eq.s32.totalorder %s38, 0
    %s41 = sadd.s32 %s40, 1
    %s42 = scalar_select %p39, %s40, %s41
    %p45 = pneg %p39
    %p46 = scmp.eq.s32.totalorder %s16, 1
    %p47 = por %p45, %p46
    %p48 = scmp.ne.s32.totalorder %s40, %s43
    %p49 = scmp.eq.s32.totalorder %s16, 0
    %p50 = por %p48, %p49
    %p51 = scmp.ne.s32.totalorder %s40, %s43
    %p52 = scmp.eq.s32.totalorder %s21, 1
    %p53 = por %p51, %p52
    %p54 = scmp.ne.s32.totalorder %s43, %s44
    %p55 = scmp.eq.s32.totalorder %s21, 0
    %p56 = por %p54, %p55
    %p57 = scmp.ne.s32.totalorder %s43, %s44
    %p58 = scmp.eq.s32.totalorder %s22, 1
    %p59 = por %p57, %p58
    %p61 = scmp.ne.s32.totalorder %s44, %s60
    %p62 = scmp.eq.s32.totalorder %s22, 0
    %p63 = por %p61, %p62
    %s64 = ssub.s32 %s24, %s31
    %s65 = ssub.s32 %s23, %s35
    %s66 = sor.u32 %s64, %s65
    %p67 = scmp.eq.s32.totalorder %s66, 0
    %s69 = sadd.s32 %s68, 1
    %s70 = scalar_select %p67, %s68, %s69
    %p73 = pneg %p67
    %p74 = scmp.eq.s32.totalorder %s16, 1
    %p75 = por %p73, %p74
    %p76 = scmp.ne.s32.totalorder %s68, %s71
    %p77 = scmp.eq.s32.totalorder %s16, 0
    %p78 = por %p76, %p77
    %p79 = scmp.ne.s32.totalorder %s68, %s71
    %p80 = scmp.eq.s32.totalorder %s21, 1
    %p81 = por %p79, %p80
    %p82 = scmp.ne.s32.totalorder %s71, %s72
    %p83 = scmp.eq.s32.totalorder %s21, 0
    %p84 = por %p82, %p83
    %p85 = scmp.ne.s32.totalorder %s71, %s72
    %p86 = scmp.eq.s32.totalorder %s22, 1
    %p87 = por %p85, %p86
    %p89 = scmp.ne.s32.totalorder %s72, %s88
    %p90 = scmp.eq.s32.totalorder %s22, 0
    %p91 = por %p89, %p90
    %s92 = ssub.s32 %s23, %s35
    %p93 = scmp.eq.s32.totalorder %s92, 0
    %s95 = sadd.s32 %s94, 1
    %s96 = scalar_select %p93, %s94, %s95
    %p99 = pneg %p93
    %p100 = scmp.eq.s32.totalorder %s16, 1
    %p101 = por %p99, %p100
    %p102 = scmp.ne.s32.totalorder %s94, %s97
    %p103 = scmp.eq.s32.totalorder %s16, 0
    %p104 = por %p102, %p103
    %p105 = scmp.ne.s32.totalorder %s94, %s97
    %p106 = scmp.eq.s32.totalorder %s21, 1
    %p107 = por %p105, %p106
    %p108 = scmp.ne.s32.totalorder %s97, %s98
    %p109 = scmp.eq.s32.totalorder %s21, 0
    %p110 = por %p108, %p109
    %p111 = scmp.ne.s32.totalorder %s97, %s98
    %p112 = scmp.eq.s32.totalorder %s22, 1
    %p113 = por %p111, %p112
    %p115 = scmp.ne.s32.totalorder %s98, %s114
    %p116 = scmp.eq.s32.totalorder %s22, 0
    %p117 = por %p115, %p116
    %s118 = ssub.s32 %s23, %s35
    %p119 = scmp.eq.s32.totalorder %s118, 0
    %s121 = sadd.s32 %s120, 1
    %s122 = scalar_select %p119, %s120, %s121
    %p125 = pneg %p119
    %p126 = scmp.eq.s32.totalorder %s16, 1
    %p127 = por %p125, %p126
    %p128 = scmp.ne.s32.totalorder %s120, %s123
    %p129 = scmp.eq.s32.totalorder %s16, 0
    %p130 = por %p128, %p129
    %p131 = scmp.ne.s32.totalorder %s120, %s123
    %p132 = scmp.eq.s32.totalorder %s21, 1
    %p133 = por %p131, %p132
    %p134 = scmp.ne.s32.totalorder %s123, %s124
    %p135 = scmp.eq.s32.totalorder %s21, 0
    %p136 = por %p134, %p135
    %p137 = scmp.ne.s32.totalorder %s123, %s124
    %p138 = scmp.eq.s32.totalorder %s22, 1
    %p139 = por %p137, %p138
    %p141 = scmp.ne.s32.totalorder %s124, %s140
    %p142 = scmp.eq.s32.totalorder %s22, 0
    %p143 = por %p141, %p142
    %s144 = ssub.s32 %s23, %s35
    %p145 = scmp.eq.s32.totalorder %s144, 0
    %s147 = sadd.s32 %s146, 1
    %s148 = scalar_select %p145, %s146, %s147
    %p151 = pneg %p145
    %p152 = scmp.eq.s32.totalorder %s16, 1
    %p153 = por %p151, %p152
    %p154 = scmp.ne.s32.totalorder %s146, %s149
    %p155 = scmp.eq.s32.totalorder %s16, 0
    %p156 = por %p154, %p155
    %p157 = scmp.ne.s32.totalorder %s146, %s149
    %p158 = scmp.eq.s32.totalorder %s21, 1
    %p159 = por %p157, %p158
    %p160 = scmp.ne.s32.totalorder %s149, %s150
    %p161 = scmp.eq.s32.totalorder %s21, 0
    %p162 = por %p160, %p161
    %p163 = scmp.ne.s32.totalorder %s149, %s150
    %p164 = scmp.eq.s32.totalorder %s22, 1
    %p165 = por %p163, %p164
    %p167 = scmp.ne.s32.totalorder %s150, %s166
    %p168 = scmp.eq.s32.totalorder %s22, 0
    %p169 = por %p167, %p168
    %s170 = ssub.s32 %s23, %s35
    %p171 = scmp.eq.s32.totalorder %s170, 0
    %s173 = sadd.s32 %s172, 1
    %s174 = scalar_select %p171, %s172, %s173
    %p177 = pneg %p171
    %p178 = scmp.eq.s32.totalorder %s16, 1
    %p179 = por %p177, %p178
    %p180 = scmp.ne.s32.totalorder %s172, %s175
    %p181 = scmp.eq.s32.totalorder %s16, 0
    %p182 = por %p180, %p181
    %p183 = scmp.ne.s32.totalorder %s172, %s175
    %p184 = scmp.eq.s32.totalorder %s21, 1
    %p185 = por %p183, %p184
    %p186 = scmp.ne.s32.totalorder %s175, %s176
    %p187 = scmp.eq.s32.totalorder %s21, 0
    %p188 = por %p186, %p187
    %p189 = scmp.ne.s32.totalorder %s175, %s176
    %p190 = scmp.eq.s32.totalorder %s22, 1
    %p191 = por %p189, %p190
    %p193 = scmp.ne.s32.totalorder %s176, %s192
    %p194 = scmp.eq.s32.totalorder %s22, 0
    %p195 = por %p193, %p194
    %s196 = ssub.s32 %s24, %s31
    %s197 = ssub.s32 %s23, %s35
    %s198 = sor.u32 %s196, %s197
    %p199 = scmp.eq.s32.totalorder %s198, 0
    %s201 = sadd.s32 %s200, 1
    %s202 = scalar_select %p199, %s200, %s201
    %p205 = pneg %p199
    %p206 = scmp.eq.s32.totalorder %s16, 1
    %p207 = por %p205, %p206
    %p208 = scmp.ne.s32.totalorder %s200, %s203
    %p209 = scmp.eq.s32.totalorder %s16, 0
    %p210 = por %p208, %p209
    %p211 = scmp.ne.s32.totalorder %s200, %s203
    %p212 = scmp.eq.s32.totalorder %s21, 1
    %p213 = por %p211, %p212
    %p214 = scmp.ne.s32.totalorder %s203, %s204
    %p215 = scmp.eq.s32.totalorder %s21, 0
    %p216 = por %p214, %p215
    %p217 = scmp.ne.s32.totalorder %s203, %s204
    %p218 = scmp.eq.s32.totalorder %s22, 1
    %p219 = por %p217, %p218
    %p221 = scmp.ne.s32.totalorder %s204, %s220
    %p222 = scmp.eq.s32.totalorder %s22, 0
    %p223 = por %p221, %p222
    %s224 = ssub.s32 %s24, %s31
    %s225 = ssub.s32 %s23, %s35
    %s226 = sor.u32 %s224, %s225
    %p227 = scmp.eq.s32.totalorder %s226, 0
    %s229 = sadd.s32 %s228, 1
    %s230 = scalar_select %p227, %s228, %s229
    %p233 = pneg %p227
    %p234 = scmp.eq.s32.totalorder %s16, 1
    %p235 = por %p233, %p234
    %p236 = scmp.ne.s32.totalorder %s228, %s231
    %p237 = scmp.eq.s32.totalorder %s16, 0
    %p238 = por %p236, %p237
    %p239 = scmp.ne.s32.totalorder %s228, %s231
    %p240 = scmp.eq.s32.totalorder %s21, 1
    %p241 = por %p239, %p240
    %p242 = scmp.ne.s32.totalorder %s231, %s232
    %p243 = scmp.eq.s32.totalorder %s21, 0
    %p244 = por %p242, %p243
    %p245 = scmp.ne.s32.totalorder %s231, %s232
    %p246 = scmp.eq.s32.totalorder %s22, 1
    %p247 = por %p245, %p246
    %p249 = scmp.ne.s32.totalorder %s232, %s248
    %p250 = scmp.eq.s32.totalorder %s22, 0
    %p251 = por %p249, %p250
    %s252 = ssub.s32 %s24, %s31
    %s253 = ssub.s32 %s23, %s35
    %s254 = sor.u32 %s252, %s253
    %p255 = scmp.eq.s32.totalorder %s254, 0
    %s257 = sadd.s32 %s256, 1
    %s258 = scalar_select %p255, %s256, %s257
    %p261 = pneg %p255
    %p262 = scmp.eq.s32.totalorder %s16, 1
    %p263 = por %p261, %p262
    %p264 = scmp.ne.s32.totalorder %s256, %s259
    %p265 = scmp.eq.s32.totalorder %s16, 0
    %p266 = por %p264, %p265
    %p267 = scmp.ne.s32.totalorder %s256, %s259
    %p268 = scmp.eq.s32.totalorder %s21, 1
    %p269 = por %p267, %p268
    %p270 = scmp.ne.s32.totalorder %s259, %s260
    %p271 = scmp.eq.s32.totalorder %s21, 0
    %p272 = por %p270, %p271
    %p273 = scmp.ne.s32.totalorder %s259, %s260
    %p274 = scmp.eq.s32.totalorder %s22, 1
    %p275 = por %p273, %p274
    %p277 = scmp.ne.s32.totalorder %s260, %s276
    %p278 = scmp.eq.s32.totalorder %s22, 0
    %p279 = por %p277, %p278
    %s280 = ssub.s32 %s24, %s31
    %s281 = ssub.s32 %s23, %s35
    %s282 = sor.u32 %s280, %s281
    %p283 = scmp.eq.s32.totalorder %s282, 0
    %s285 = sadd.s32 %s284, 1
    %s286 = scalar_select %p283, %s284, %s285
    %p289 = pneg %p283
    %p290 = scmp.eq.s32.totalorder %s16, 1
    %p291 = por %p289, %p290
    %p292 = scmp.ne.s32.totalorder %s284, %s287
    %p293 = scmp.eq.s32.totalorder %s16, 0
    %p294 = por %p292, %p293
    %p295 = scmp.ne.s32.totalorder %s284, %s287
    %p296 = scmp.eq.s32.totalorder %s21, 1
    %p297 = por %p295, %p296
    %p298 = scmp.ne.s32.totalorder %s287, %s288
    %p299 = scmp.eq.s32.totalorder %s21, 0
    %p300 = por %p298, %p299
    %p301 = scmp.ne.s32.totalorder %s287, %s288
    %p302 = scmp.eq.s32.totalorder %s22, 1
    %p303 = por %p301, %p302
    %p305 = scmp.ne.s32.totalorder %s288, %s304
    %p306 = scmp.eq.s32.totalorder %s22, 0
    %p307 = por %p305, %p306
    %p308 = scmp.le.s32.totalorder 1, %s16
    %p309 = scmp.lt.s32.totalorder %s16, 3
    %p310 = pnand %p308, %p309
    %p311 = pneg %p310
    // Predicated region
    $region9: #{a_call__.3} parent=5 // pred_check
      _
    $region10: #{a_call__.3} parent=5 // pred_check_branch
      %313 = sbr.rel (%p310) target = $region12
    $region11: #{a_call__.3} parent=5 // pred_region
      %s314 = ssub.s32 %s16, 1
      // Predicated region
      $region13: #{a_call__.3} parent=11 // pred_check
        %p315 = pneg %p110
      $region14: #{a_call__.3} parent=11 // pred_check_branch
        %317 = sbr.rel (%p315) target = $region16
      $region15: #{a_call__.3} parent=11 // pred_region
        %s318 = smul.u32 2, %s25
        %p319 = scmp.lt.s32.totalorder %s318, 1
        %s320 = scalar_select %p319, %s318, 1
        %s321 = smul.addr %s320, 8
        %s322 = scalar_lea.vmem %s2, %s321
        %s323 = smul.u32 2, %s25
      $region16: #{a_call__.3} parent=11 // pred_fallthru
        _
      // Predicated region
      $region17: #{a_call__.3} parent=11 // pred_check
        %p324 = pneg %p136
      $region18: #{a_call__.3} parent=11 // pred_check_branch
        %326 = sbr.rel (%p324) target = $region20
      $region19: #{a_call__.3} parent=11 // pred_region
        %s327 = smul.u32 2, %s25
        %p328 = scmp.lt.s32.totalorder %s327, 1
        %s329 = scalar_select %p328, %s327, 1
        %s330 = smul.addr %s329, 8
        %s331 = scalar_lea.vmem %s3, %s330
        %s332 = smul.u32 2, %s25
      $region20: #{a_call__.3} parent=11 // pred_fallthru
        _
      // Predicated region
      $region21: #{a_call__.3} parent=11 // pred_check
        %p333 = pneg %p162
      $region22: #{a_call__.3} parent=11 // pred_check_branch
        %335 = sbr.rel (%p333) target = $region24
      $region23: #{a_call__.3} parent=11 // pred_region
        %s336 = smul.u32 2, %s25
        %p337 = scmp.lt.s32.totalorder %s336, 1
        %s338 = scalar_select %p337, %s336, 1
        %s339 = smul.addr %s338, 8
        %s340 = scalar_lea.vmem %s4, %s339
        %s341 = smul.u32 2, %s25
      $region24: #{a_call__.3} parent=11 // pred_fallthru
        _
      // Predicated region
      $region25: #{a_call__.3} parent=11 // pred_check
        %p342 = pneg %p188
      $region26: #{a_call__.3} parent=11 // pred_check_branch
        %344 = sbr.rel (%p342) target = $region28
      $region27: #{a_call__.3} parent=11 // pred_region
        %s345 = smul.u32 2, %s25
        %p346 = scmp.lt.s32.totalorder %s345, 1
        %s347 = scalar_select %p346, %s345, 1
        %s348 = smul.addr %s347, 8
        %s349 = scalar_lea.vmem %s5, %s348
        %s350 = smul.u32 2, %s25
      $region28: #{a_call__.3} parent=11 // pred_fallthru
        _
    $region12: #{a_call__.3} parent=5 // pred_fallthru
      _
    %p351 = scmp.lt.s32.totalorder %s16, 2
    // Predicated region
    $region29: #{a_call__.3} parent=5 // pred_check
      %p352 = pneg %p351
    $region30: #{a_call__.3} parent=5 // pred_check_branch
      %354 = sbr.rel (%p352) target = $region32
    $region31: #{a_call__.3} parent=5 // pred_region
      // Predicated region
      $region33: #{a_call__.3} parent=31 // pred_check
        %p355 = pneg %p50
      $region34: #{a_call__.3} parent=31 // pred_check_branch
        %357 = sbr.rel (%p355) target = $region36
      $region35: #{a_call__.3} parent=31 // pred_region
        %s358 = smul.u32 2, %s23
        %p359 = scmp.lt.s32.totalorder %s24, 1
        %s360 = scalar_select %p359, %s24, 1
        %p361 = scmp.lt.s32.totalorder %s358, 1
        %s362 = scalar_select %p361, %s358, 1
        %s363 = smul.addr %s360, 2
        %s364 = sadd.s32 %s362, %s363
        %s365 = smul.addr %s364, 8
        %s366 = scalar_lea.vmem %s0, %s365
        %s367 = smul.u32 2, %s23
      $region36: #{a_call__.3} parent=31 // pred_fallthru
        _
      // Predicated region
      $region37: #{a_call__.3} parent=31 // pred_check
        %p368 = pneg %p78
      $region38: #{a_call__.3} parent=31 // pred_check_branch
        %370 = sbr.rel (%p368) target = $region40
      $region39: #{a_call__.3} parent=31 // pred_region
        %s371 = smul.u32 2, %s23
        %p372 = scmp.lt.s32.totalorder %s24, 1
        %s373 = scalar_select %p372, %s24, 1
        %p374 = scmp.lt.s32.totalorder %s371, 1
        %s375 = scalar_select %p374, %s371, 1
        %s376 = smul.addr %s373, 2
        %s377 = sadd.s32 %s375, %s376
        %s378 = smul.addr %s377, 8
        %s379 = scalar_lea.vmem %s1, %s378
        %s380 = smul.u32 2, %s23
      $region40: #{a_call__.3} parent=31 // pred_fallthru
        _
    $region32: #{a_call__.3} parent=5 // pred_fallthru
      _
    %p381 = scmp.le.s32.totalorder 1, %s16
    %p382 = scmp.lt.s32.totalorder %s16, 3
    %p383 = pnand %p381, %p382
    %p384 = pneg %p383
    // Predicated region
    $region41: #{a_call__.3} parent=5 // pred_check
      _
    $region42: #{a_call__.3} parent=5 // pred_check_branch
      %386 = sbr.rel (%p383) target = $region44
    $region43: #{a_call__.3} parent=5 // pred_region
      %s387 = ssub.s32 %s16, 1
      %s388 = smul.u32 2, %s25
      %p389 = scmp.lt.s32.totalorder %s26, 1
      %s390 = scalar_select %p389, %s26, 1
      %p391 = scmp.lt.s32.totalorder %s388, 1
      %s392 = scalar_select %p391, %s388, 1
      %s393 = smul.addr %s390, 2
      %s394 = sadd.s32 %s392, %s393
      %s395 = smul.addr %s394, 8
      %s396 = scalar_lea.vmem %s0, %s395
      %p397 = pneg %p56
      %p398 = pneg %p53
      %s399 = smul.u32 2, %s25
      %p400 = scmp.lt.s32.totalorder %s26, 1
      %s401 = scalar_select %p400, %s26, 1
      %p402 = scmp.lt.s32.totalorder %s399, 1
      %s403 = scalar_select %p402, %s399, 1
      %s404 = smul.addr %s401, 2
      %s405 = sadd.s32 %s403, %s404
      %s406 = smul.addr %s405, 8
      %s407 = scalar_lea.vmem %s1, %s406
      %p408 = pneg %p84
      %p409 = pneg %p81
      %s410 = smul.u32 2, %s25
      %p411 = scmp.lt.s32.totalorder %s410, 1
      %s412 = scalar_select %p411, %s410, 1
      %s413 = smul.addr %s412, 8
      %s414 = scalar_lea.vmem %s2, %s413
      %p415 = pneg %p110
      %p416 = pneg %p107
      %s417 = smul.u32 2, %s25
      %p418 = scmp.lt.s32.totalorder %s417, 1
      %s419 = scalar_select %p418, %s417, 1
      %s420 = smul.addr %s419, 8
      %s421 = scalar_lea.vmem %s3, %s420
      %p422 = pneg %p136
      %p423 = pneg %p133
      %s424 = smul.u32 2, %s25
      %p425 = scmp.lt.s32.totalorder %s424, 1
      %s426 = scalar_select %p425, %s424, 1
      %s427 = smul.addr %s426, 8
      %s428 = scalar_lea.vmem %s4, %s427
      %p429 = pneg %p162
      %p430 = pneg %p159
      %s431 = smul.u32 2, %s25
      %p432 = scmp.lt.s32.totalorder %s431, 1
      %s433 = scalar_select %p432, %s431, 1
      %s434 = smul.addr %s433, 8
      %s435 = scalar_lea.vmem %s5, %s434
      %p436 = pneg %p188
      %p437 = pneg %p185
      %p438 = pneg %p216
      %p439 = pneg %p213
      %s440 = smul.u32 2, %s25
      %p441 = scmp.lt.s32.totalorder %s26, 1
      %s442 = scalar_select %p441, %s26, 1
      %p443 = scmp.lt.s32.totalorder %s440, 1
      %s444 = scalar_select %p443, %s440, 1
      %s445 = smul.addr %s442, 2
      %s446 = sadd.s32 %s444, %s445
      %s447 = smul.addr %s446, 8
      %s448 = scalar_lea.vmem %s6, %s447
      %p449 = pneg %p244
      %p450 = pneg %p241
      %s451 = smul.u32 2, %s25
      %p452 = scmp.lt.s32.totalorder %s26, 1
      %s453 = scalar_select %p452, %s26, 1
      %p454 = scmp.lt.s32.totalorder %s451, 1
      %s455 = scalar_select %p454, %s451, 1
      %s456 = smul.addr %s453, 2
      %s457 = sadd.s32 %s455, %s456
      %s458 = smul.addr %s457, 8
      %s459 = scalar_lea.vmem %s7, %s458
      %p460 = pneg %p272
      %p461 = pneg %p269
      %s462 = smul.u32 2, %s25
      %p463 = scmp.lt.s32.totalorder %s26, 1
      %s464 = scalar_select %p463, %s26, 1
      %p465 = scmp.lt.s32.totalorder %s462, 1
      %s466 = scalar_select %p465, %s462, 1
      %s467 = smul.addr %s464, 2
      %s468 = sadd.s32 %s466, %s467
      %s469 = smul.addr %s468, 8
      %s470 = scalar_lea.vmem %s8, %s469
      %p471 = pneg %p300
      %p472 = pneg %p297
      %s473 = smul.u32 2, %s25
      %p474 = scmp.lt.s32.totalorder %s26, 1
      %s475 = scalar_select %p474, %s26, 1
      %p476 = scmp.lt.s32.totalorder %s473, 1
      %s477 = scalar_select %p476, %s473, 1
      %s478 = smul.addr %s475, 2
      %s479 = sadd.s32 %s477, %s478
      %s480 = smul.addr %s479, 8
      %s481 = scalar_lea.vmem %s9, %s480
      %s482 = smul.u32 2, %s25
      %p483 = scmp.lt.s32.totalorder %s26, 1
      %s484 = scalar_select %p483, %s26, 1
      %p485 = scmp.lt.s32.totalorder %s482, 1
      %s486 = scalar_select %p485, %s482, 1
      %s487 = smul.addr %s484, 2
      %s488 = sadd.s32 %s486, %s487
      %s489 = smul.addr %s488, 8
      %s490 = scalar_lea.vmem %s0, %s489
      %s491 = smul.u32 2, %s25
      %s492 = smul.u32 2, %s25
      %p493 = scmp.lt.s32.totalorder %s26, 1
      %s494 = scalar_select %p493, %s26, 1
      %p495 = scmp.lt.s32.totalorder %s492, 1
      %s496 = scalar_select %p495, %s492, 1
      %s497 = smul.addr %s494, 2
      %s498 = sadd.s32 %s496, %s497
      %s499 = smul.addr %s498, 8
      %s500 = scalar_lea.vmem %s1, %s499
      %s501 = smul.u32 2, %s25
      %s502 = smul.u32 2, %s25
      %p503 = scmp.lt.s32.totalorder %s502, 1
      %s504 = scalar_select %p503, %s502, 1
      %s505 = smul.addr %s504, 8
      %s506 = scalar_lea.vmem %s2, %s505
      %s507 = smul.u32 2, %s25
      %s508 = smul.u32 2, %s25
      %p509 = scmp.lt.s32.totalorder %s508, 1
      %s510 = scalar_select %p509, %s508, 1
      %s511 = smul.addr %s510, 8
      %s512 = scalar_lea.vmem %s3, %s511
      %s513 = smul.u32 2, %s25
      %s514 = smul.u32 2, %s25
      %p515 = scmp.lt.s32.totalorder %s514, 1
      %s516 = scalar_select %p515, %s514, 1
      %s517 = smul.addr %s516, 8
      %s518 = scalar_lea.vmem %s4, %s517
      %s519 = smul.u32 2, %s25
      %s520 = smul.u32 2, %s25
      %p521 = scmp.lt.s32.totalorder %s520, 1
      %s522 = scalar_select %p521, %s520, 1
      %s523 = smul.addr %s522, 8
      %s524 = scalar_lea.vmem %s5, %s523
      %s525 = smul.u32 2, %s25
      %s526 = smul.u32 2, %s25
      %p527 = scmp.lt.s32.totalorder %s26, 1
      %s528 = scalar_select %p527, %s26, 1
      %p529 = scmp.lt.s32.totalorder %s526, 1
      %s530 = scalar_select %p529, %s526, 1
      %s531 = smul.addr %s528, 2
      %s532 = sadd.s32 %s530, %s531
      %s533 = smul.addr %s532, 8
      %s534 = scalar_lea.vmem %s6, %s533
      %s535 = smul.u32 2, %s25
      %s536 = smul.u32 2, %s25
      %p537 = scmp.lt.s32.totalorder %s26, 1
      %s538 = scalar_select %p537, %s26, 1
      %p539 = scmp.lt.s32.totalorder %s536, 1
      %s540 = scalar_select %p539, %s536, 1
      %s541 = smul.addr %s538, 2
      %s542 = sadd.s32 %s540, %s541
      %s543 = smul.addr %s542, 8
      %s544 = scalar_lea.vmem %s7, %s543
      %s545 = smul.u32 2, %s25
      %s546 = smul.u32 2, %s25
      %p547 = scmp.lt.s32.totalorder %s26, 1
      %s548 = scalar_select %p547, %s26, 1
      %p549 = scmp.lt.s32.totalorder %s546, 1
      %s550 = scalar_select %p549, %s546, 1
      %s551 = smul.addr %s548, 2
      %s552 = sadd.s32 %s550, %s551
      %s553 = smul.addr %s552, 8
      %s554 = scalar_lea.vmem %s8, %s553
      %s555 = smul.u32 2, %s25
      %s556 = smul.u32 2, %s25
      %p557 = scmp.lt.s32.totalorder %s26, 1
      %s558 = scalar_select %p557, %s26, 1
      %p559 = scmp.lt.s32.totalorder %s556, 1
      %s560 = scalar_select %p559, %s556, 1
      %s561 = smul.addr %s558, 2
      %s562 = sadd.s32 %s560, %s561
      %s563 = smul.addr %s562, 8
      %s564 = scalar_lea.vmem %s9, %s563
      %s565 = smul.u32 2, %s25
      %v566 = vld [vmem:[%s490] sm:$0xff]
      %v567 = vld [vmem:[%s490 + $0x8] sm:$0xff]
      %v568 = vld [vmem:[%s500] sm:$0xff]
      %v569 = vld [vmem:[%s500 + $0x8] sm:$0xff]
      %v570 = vld [vmem:[%s506] sm:$0xff]
      %v571 = vld [vmem:[%s506 + $0x8] sm:$0xff]
      %v572 = vld [vmem:[%s512] sm:$0xff]
      %v573 = vld [vmem:[%s512 + $0x8] sm:$0xff]
      %v574 = vmul.f32 %v566, %v570
      %v575 = vmul.f32 %v567, %v571
      %v576 = vmul.f32 %v568, %v572
      %v577 = vmul.f32 %v569, %v573
      %v578 = vsub.f32 %v574, %v576
      %v579 = vsub.f32 %v575, %v577
      %580 = vst [vmem:[%s534] sm:$0xff] %v578
      %581 = vst [vmem:[%s534 + $0x8] sm:$0xff] %v579
      %v582 = vmul.f32 %v566, %v572
      %v583 = vmul.f32 %v567, %v573
      %v584 = vmul.f32 %v568, %v570
      %v585 = vmul.f32 %v569, %v571
      %v586 = vadd.f32 %v582, %v584
      %v587 = vadd.f32 %v583, %v585
      %588 = vst [vmem:[%s544] sm:$0xff] %v586
      %589 = vst [vmem:[%s544 + $0x8] sm:$0xff] %v587
      %v590 = vld [vmem:[%s518] sm:$0xff]
      %v591 = vld [vmem:[%s518 + $0x8] sm:$0xff]
      %v592 = vld [vmem:[%s524] sm:$0xff]
      %v593 = vld [vmem:[%s524 + $0x8] sm:$0xff]
      %v594 = vmul.f32 %v566, %v590
      %v595 = vmul.f32 %v567, %v591
      %v596 = vmul.f32 %v568, %v592
      %v597 = vmul.f32 %v569, %v593
      %v598 = vsub.f32 %v594, %v596
      %v599 = vsub.f32 %v595, %v597
      %600 = vst [vmem:[%s554] sm:$0xff] %v598
      %601 = vst [vmem:[%s554 + $0x8] sm:$0xff] %v599
      %v602 = vmul.f32 %v566, %v592
      %v603 = vmul.f32 %v567, %v593
      %v604 = vmul.f32 %v568, %v590
      %v605 = vmul.f32 %v569, %v591
      %v606 = vadd.f32 %v602, %v604
      %v607 = vadd.f32 %v603, %v605
      %608 = vst [vmem:[%s564] sm:$0xff] %v606
      %609 = vst [vmem:[%s564 + $0x8] sm:$0xff] %v607
      %s610 = smul.u32 2, %s25
      %p611 = scmp.lt.s32.totalorder %s26, 1
      %s612 = scalar_select %p611, %s26, 1
      %p613 = scmp.lt.s32.totalorder %s610, 1
      %s614 = scalar_select %p613, %s610, 1
      %s615 = smul.addr %s612, 2
      %s616 = sadd.s32 %s614, %s615
      %s617 = smul.addr %s616, 8
      %s618 = scalar_lea.vmem %s6, %s617
      %s619 = smul.u32 2, %s25
      %p620 = scmp.lt.s32.totalorder %s26, 1
      %s621 = scalar_select %p620, %s26, 1
      %p622 = scmp.lt.s32.totalorder %s619, 1
      %s623 = scalar_select %p622, %s619, 1
      %s624 = smul.addr %s621, 2
      %s625 = sadd.s32 %s623, %s624
      %s626 = smul.addr %s625, 8
      %s627 = scalar_lea.vmem %s7, %s626
      %s628 = smul.u32 2, %s25
      %p629 = scmp.lt.s32.totalorder %s26, 1
      %s630 = scalar_select %p629, %s26, 1
      %p631 = scmp.lt.s32.totalorder %s628, 1
      %s632 = scalar_select %p631, %s628, 1
      %s633 = smul.addr %s630, 2
      %s634 = sadd.s32 %s632, %s633
      %s635 = smul.addr %s634, 8
      %s636 = scalar_lea.vmem %s8, %s635
      %s637 = smul.u32 2, %s25
      %p638 = scmp.lt.s32.totalorder %s26, 1
      %s639 = scalar_select %p638, %s26, 1
      %p640 = scmp.lt.s32.totalorder %s637, 1
      %s641 = scalar_select %p640, %s637, 1
      %s642 = smul.addr %s639, 2
      %s643 = sadd.s32 %s641, %s642
      %s644 = smul.addr %s643, 8
      %s645 = scalar_lea.vmem %s9, %s644
      // Predicated region
      $region45: #{a_call__.3} parent=43 // pred_check
        %p646 = pneg %p213
      $region46: #{a_call__.3} parent=43 // pred_check_branch
        %648 = sbr.rel (%p646) target = $region48
      $region47: #{a_call__.3} parent=43 // pred_region
        %s649 = smul.u32 2, %s25
      $region48: #{a_call__.3} parent=43 // pred_fallthru
        _
      // Predicated region
      $region49: #{a_call__.3} parent=43 // pred_check
        %p650 = pneg %p241
      $region50: #{a_call__.3} parent=43 // pred_check_branch
        %652 = sbr.rel (%p650) target = $region52
      $region51: #{a_call__.3} parent=43 // pred_region
        %s653 = smul.u32 2, %s25
      $region52: #{a_call__.3} parent=43 // pred_fallthru
        _
      // Predicated region
      $region53: #{a_call__.3} parent=43 // pred_check
        %p654 = pneg %p269
      $region54: #{a_call__.3} parent=43 // pred_check_branch
        %656 = sbr.rel (%p654) target = $region56
      $region55: #{a_call__.3} parent=43 // pred_region
        %s657 = smul.u32 2, %s25
      $region56: #{a_call__.3} parent=43 // pred_fallthru
        _
      // Predicated region
      $region57: #{a_call__.3} parent=43 // pred_check
        %p658 = pneg %p297
      $region58: #{a_call__.3} parent=43 // pred_check_branch
        %660 = sbr.rel (%p658) target = $region60
      $region59: #{a_call__.3} parent=43 // pred_region
        %s661 = smul.u32 2, %s25
      $region60: #{a_call__.3} parent=43 // pred_fallthru
        _
    $region44: #{a_call__.3} parent=5 // pred_fallthru
      _
    %p662 = scmp.le.s32.totalorder 2, %s16
    // Predicated region
    $region61: #{a_call__.3} parent=5 // pred_check
      %p663 = pneg %p662
    $region62: #{a_call__.3} parent=5 // pred_check_branch
      %665 = sbr.rel (%p663) target = $region64
    $region63: #{a_call__.3} parent=5 // pred_region
      %s666 = ssub.s32 %s16, 2
      // Predicated region
      $region65: #{a_call__.3} parent=63 // pred_check
        %p667 = pneg %p219
      $region66: #{a_call__.3} parent=63 // pred_check_branch
        %669 = sbr.rel (%p667) target = $region68
      $region67: #{a_call__.3} parent=63 // pred_region
        %s670 = smul.u32 2, %s27
        %p671 = scmp.lt.s32.totalorder %s28, 1
        %s672 = scalar_select %p671, %s28, 1
        %p673 = scmp.lt.s32.totalorder %s670, 1
        %s674 = scalar_select %p673, %s670, 1
        %s675 = smul.addr %s672, 2
        %s676 = sadd.s32 %s674, %s675
        %s677 = smul.addr %s676, 8
        %s678 = scalar_lea.vmem %s6, %s677
      $region68: #{a_call__.3} parent=63 // pred_fallthru
        _
      // Predicated region
      $region69: #{a_call__.3} parent=63 // pred_check
        %p679 = pneg %p247
      $region70: #{a_call__.3} parent=63 // pred_check_branch
        %681 = sbr.rel (%p679) target = $region72
      $region71: #{a_call__.3} parent=63 // pred_region
        %s682 = smul.u32 2, %s27
        %p683 = scmp.lt.s32.totalorder %s28, 1
        %s684 = scalar_select %p683, %s28, 1
        %p685 = scmp.lt.s32.totalorder %s682, 1
        %s686 = scalar_select %p685, %s682, 1
        %s687 = smul.addr %s684, 2
        %s688 = sadd.s32 %s686, %s687
        %s689 = smul.addr %s688, 8
        %s690 = scalar_lea.vmem %s7, %s689
      $region72: #{a_call__.3} parent=63 // pred_fallthru
        _
      // Predicated region
      $region73: #{a_call__.3} parent=63 // pred_check
        %p691 = pneg %p275
      $region74: #{a_call__.3} parent=63 // pred_check_branch
        %693 = sbr.rel (%p691) target = $region76
      $region75: #{a_call__.3} parent=63 // pred_region
        %s694 = smul.u32 2, %s27
        %p695 = scmp.lt.s32.totalorder %s28, 1
        %s696 = scalar_select %p695, %s28, 1
        %p697 = scmp.lt.s32.totalorder %s694, 1
        %s698 = scalar_select %p697, %s694, 1
        %s699 = smul.addr %s696, 2
        %s700 = sadd.s32 %s698, %s699
        %s701 = smul.addr %s700, 8
        %s702 = scalar_lea.vmem %s8, %s701
      $region76: #{a_call__.3} parent=63 // pred_fallthru
        _
      // Predicated region
      $region77: #{a_call__.3} parent=63 // pred_check
        %p703 = pneg %p303
      $region78: #{a_call__.3} parent=63 // pred_check_branch
        %705 = sbr.rel (%p703) target = $region80
      $region79: #{a_call__.3} parent=63 // pred_region
        %s706 = smul.u32 2, %s27
        %p707 = scmp.lt.s32.totalorder %s28, 1
        %s708 = scalar_select %p707, %s28, 1
        %p709 = scmp.lt.s32.totalorder %s706, 1
        %s710 = scalar_select %p709, %s706, 1
        %s711 = smul.addr %s708, 2
        %s712 = sadd.s32 %s710, %s711
        %s713 = smul.addr %s712, 8
        %s714 = scalar_lea.vmem %s9, %s713
      $region80: #{a_call__.3} parent=63 // pred_fallthru
        _
    $region64: #{a_call__.3} parent=5 // pred_fallthru
      _
  $region6: #{a_call__.3} parent=0 // loop_footer
    %s20 = sadd.s32 1, %s16
  $region7: #{a_call__.3} parent=0 // loop_footer_branch
    %15 = sbr.rel target = $region3
  $region8: #{a_call__.3} parent=0 // loop_exit
    _

// kernel: a_call__.4
$region0: #{a_call__.4}
  #allocation0 [shape = 'u32[]', space=smem, size = 0x4, offset = 0x4, fixed_abs, tag = 'smem constant byte address 0x4 - core index']
  #allocation1 [shape = 'u32[72,128]{1,0:T(1,128)}', space=vmem, size = 0x9000, scoped, tag = 'internal scratch']
  %s0 = inlined_call_operand.vmem [shape: f32[2,16,128], index: 0, kind: input, shape index: {}]
  %s1 = inlined_call_operand.vmem [shape: f32[2,16,128], index: 1, kind: input, shape index: {}]
  %s2 = inlined_call_operand.vmem [shape: f32[2,16,128], index: 2, kind: input, shape index: {}]
  %s3 = inlined_call_operand.vmem [shape: f32[2,16,128], index: 3, kind: input, shape index: {}]
  %s4 = inlined_call_operand.vmem [shape: f32[2,16,128], index: 4, kind: output, shape index: {0}]
  %s5 = inlined_call_operand.vmem [shape: f32[2,16,128], index: 5, kind: output, shape index: {1}]
  %6 = xla_tuple %s4, %s5
  %s7 = sld [smem:[#allocation0]]
  $region57: #{a_call__.4} parent=0
    _
  %s9 = ssub.s32 1, %s7
  %s10 = scalar_select 0, %s9, %s7
  loop: start=0, step=1, limit=4
  $region2: #{a_call__.4} parent=0 // loop_pre_header
    _
  $region3: #{a_call__.4} parent=0 // loop_header
    %s12 = sphi 0, %s16
    %p13 = scmp.ge.s32.totalorder %s12, 4
    %s19 = sphi 0, %s31
    %s20 = sphi 0, %s27
    %s21 = sphi 0, %s19
    %s22 = sphi 0, %s20
    %s23 = sphi 0, %s21
    %s24 = sphi 0, %s22
    %s36 = sphi 0, %s38
    %s39 = sphi 0, %s36
    %s40 = sphi 0, %s39
    %s56 = sphi 0, %s40
    %s64 = sphi 0, %s66
    %s67 = sphi 0, %s64
    %s68 = sphi 0, %s67
    %s84 = sphi 0, %s68
    %s92 = sphi 0, %s94
    %s95 = sphi 0, %s92
    %s96 = sphi 0, %s95
    %s112 = sphi 0, %s96
    %s120 = sphi 0, %s122
    %s123 = sphi 0, %s120
    %s124 = sphi 0, %s123
    %s140 = sphi 0, %s124
    %s148 = sphi 0, %s150
    %s151 = sphi 0, %s148
    %s152 = sphi 0, %s151
    %s168 = sphi 0, %s152
    %s176 = sphi 0, %s178
    %s179 = sphi 0, %s176
    %s180 = sphi 0, %s179
    %s196 = sphi 0, %s180
  $region4: #{a_call__.4} parent=0 // loop_header_branch
    %15 = sbr.rel (%p13) target = $region8
  $region5: #{a_call__.4} parent=0 // loop_body
    %s17 = ssub.s32 %s12, 1
    %s18 = ssub.s32 %s12, 2
    %s25 = sadd.s32 1, %s20
    %p26 = scmp.ge.s32.totalorder %s25, 2
    %s27 = scalar_select %p26, 0, %s25
    %s28 = sadd.s32 1, %s19
    %s29 = scalar_select %p26, %s28, %s19
    %p30 = scmp.ge.s32.totalorder %s29, 1
    %s31 = scalar_select %p30, 0, %s29
    %s32 = ssub.s32 %s20, %s27
    %s33 = ssub.s32 %s19, %s31
    %s34 = sor.u32 %s32, %s33
    %p35 = scmp.eq.s32.totalorder %s34, 0
    %s37 = sadd.s32 %s36, 1
    %s38 = scalar_select %p35, %s36, %s37
    %p41 = pneg %p35
    %p42 = scmp.eq.s32.totalorder %s12, 1
    %p43 = por %p41, %p42
    %p44 = scmp.ne.s32.totalorder %s36, %s39
    %p45 = scmp.eq.s32.totalorder %s12, 0
    %p46 = por %p44, %p45
    %p47 = scmp.ne.s32.totalorder %s36, %s39
    %p48 = scmp.eq.s32.totalorder %s17, 1
    %p49 = por %p47, %p48
    %p50 = scmp.ne.s32.totalorder %s39, %s40
    %p51 = scmp.eq.s32.totalorder %s17, 0
    %p52 = por %p50, %p51
    %p53 = scmp.ne.s32.totalorder %s39, %s40
    %p54 = scmp.eq.s32.totalorder %s18, 1
    %p55 = por %p53, %p54
    %p57 = scmp.ne.s32.totalorder %s40, %s56
    %p58 = scmp.eq.s32.totalorder %s18, 0
    %p59 = por %p57, %p58
    %s60 = ssub.s32 %s20, %s27
    %s61 = ssub.s32 %s19, %s31
    %s62 = sor.u32 %s60, %s61
    %p63 = scmp.eq.s32.totalorder %s62, 0
    %s65 = sadd.s32 %s64, 1
    %s66 = scalar_select %p63, %s64, %s65
    %p69 = pneg %p63
    %p70 = scmp.eq.s32.totalorder %s12, 1
    %p71 = por %p69, %p70
    %p72 = scmp.ne.s32.totalorder %s64, %s67
    %p73 = scmp.eq.s32.totalorder %s12, 0
    %p74 = por %p72, %p73
    %p75 = scmp.ne.s32.totalorder %s64, %s67
    %p76 = scmp.eq.s32.totalorder %s17, 1
    %p77 = por %p75, %p76
    %p78 = scmp.ne.s32.totalorder %s67, %s68
    %p79 = scmp.eq.s32.totalorder %s17, 0
    %p80 = por %p78, %p79
    %p81 = scmp.ne.s32.totalorder %s67, %s68
    %p82 = scmp.eq.s32.totalorder %s18, 1
    %p83 = por %p81, %p82
    %p85 = scmp.ne.s32.totalorder %s68, %s84
    %p86 = scmp.eq.s32.totalorder %s18, 0
    %p87 = por %p85, %p86
    %s88 = ssub.s32 %s20, %s27
    %s89 = ssub.s32 %s19, %s31
    %s90 = sor.u32 %s88, %s89
    %p91 = scmp.eq.s32.totalorder %s90, 0
    %s93 = sadd.s32 %s92, 1
    %s94 = scalar_select %p91, %s92, %s93
    %p97 = pneg %p91
    %p98 = scmp.eq.s32.totalorder %s12, 1
    %p99 = por %p97, %p98
    %p100 = scmp.ne.s32.totalorder %s92, %s95
    %p101 = scmp.eq.s32.totalorder %s12, 0
    %p102 = por %p100, %p101
    %p103 = scmp.ne.s32.totalorder %s92, %s95
    %p104 = scmp.eq.s32.totalorder %s17, 1
    %p105 = por %p103, %p104
    %p106 = scmp.ne.s32.totalorder %s95, %s96
    %p107 = scmp.eq.s32.totalorder %s17, 0
    %p108 = por %p106, %p107
    %p109 = scmp.ne.s32.totalorder %s95, %s96
    %p110 = scmp.eq.s32.totalorder %s18, 1
    %p111 = por %p109, %p110
    %p113 = scmp.ne.s32.totalorder %s96, %s112
    %p114 = scmp.eq.s32.totalorder %s18, 0
    %p115 = por %p113, %p114
    %s116 = ssub.s32 %s20, %s27
    %s117 = ssub.s32 %s19, %s31
    %s118 = sor.u32 %s116, %s117
    %p119 = scmp.eq.s32.totalorder %s118, 0
    %s121 = sadd.s32 %s120, 1
    %s122 = scalar_select %p119, %s120, %s121
    %p125 = pneg %p119
    %p126 = scmp.eq.s32.totalorder %s12, 1
    %p127 = por %p125, %p126
    %p128 = scmp.ne.s32.totalorder %s120, %s123
    %p129 = scmp.eq.s32.totalorder %s12, 0
    %p130 = por %p128, %p129
    %p131 = scmp.ne.s32.totalorder %s120, %s123
    %p132 = scmp.eq.s32.totalorder %s17, 1
    %p133 = por %p131, %p132
    %p134 = scmp.ne.s32.totalorder %s123, %s124
    %p135 = scmp.eq.s32.totalorder %s17, 0
    %p136 = por %p134, %p135
    %p137 = scmp.ne.s32.totalorder %s123, %s124
    %p138 = scmp.eq.s32.totalorder %s18, 1
    %p139 = por %p137, %p138
    %p141 = scmp.ne.s32.totalorder %s124, %s140
    %p142 = scmp.eq.s32.totalorder %s18, 0
    %p143 = por %p141, %p142
    %s144 = ssub.s32 %s20, %s27
    %s145 = ssub.s32 %s19, %s31
    %s146 = sor.u32 %s144, %s145
    %p147 = scmp.eq.s32.totalorder %s146, 0
    %s149 = sadd.s32 %s148, 1
    %s150 = scalar_select %p147, %s148, %s149
    %p153 = pneg %p147
    %p154 = scmp.eq.s32.totalorder %s12, 1
    %p155 = por %p153, %p154
    %p156 = scmp.ne.s32.totalorder %s148, %s151
    %p157 = scmp.eq.s32.totalorder %s12, 0
    %p158 = por %p156, %p157
    %p159 = scmp.ne.s32.totalorder %s148, %s151
    %p160 = scmp.eq.s32.totalorder %s17, 1
    %p161 = por %p159, %p160
    %p162 = scmp.ne.s32.totalorder %s151, %s152
    %p163 = scmp.eq.s32.totalorder %s17, 0
    %p164 = por %p162, %p163
    %p165 = scmp.ne.s32.totalorder %s151, %s152
    %p166 = scmp.eq.s32.totalorder %s18, 1
    %p167 = por %p165, %p166
    %p169 = scmp.ne.s32.totalorder %s152, %s168
    %p170 = scmp.eq.s32.totalorder %s18, 0
    %p171 = por %p169, %p170
    %s172 = ssub.s32 %s20, %s27
    %s173 = ssub.s32 %s19, %s31
    %s174 = sor.u32 %s172, %s173
    %p175 = scmp.eq.s32.totalorder %s174, 0
    %s177 = sadd.s32 %s176, 1
    %s178 = scalar_select %p175, %s176, %s177
    %p181 = pneg %p175
    %p182 = scmp.eq.s32.totalorder %s12, 1
    %p183 = por %p181, %p182
    %p184 = scmp.ne.s32.totalorder %s176, %s179
    %p185 = scmp.eq.s32.totalorder %s12, 0
    %p186 = por %p184, %p185
    %p187 = scmp.ne.s32.totalorder %s176, %s179
    %p188 = scmp.eq.s32.totalorder %s17, 1
    %p189 = por %p187, %p188
    %p190 = scmp.ne.s32.totalorder %s179, %s180
    %p191 = scmp.eq.s32.totalorder %s17, 0
    %p192 = por %p190, %p191
    %p193 = scmp.ne.s32.totalorder %s179, %s180
    %p194 = scmp.eq.s32.totalorder %s18, 1
    %p195 = por %p193, %p194
    %p197 = scmp.ne.s32.totalorder %s180, %s196
    %p198 = scmp.eq.s32.totalorder %s18, 0
    %p199 = por %p197, %p198
    %p200 = scmp.le.s32.totalorder 1, %s12
    %p201 = scmp.lt.s32.totalorder %s12, 3
    %p202 = pnand %p200, %p201
    %p203 = pneg %p202
    // Predicated region
    $region9: #{a_call__.4} parent=5 // pred_check
      _
    $region10: #{a_call__.4} parent=5 // pred_check_branch
      %205 = sbr.rel (%p202) target = $region12
    $region11: #{a_call__.4} parent=5 // pred_region
      %s206 = ssub.s32 %s12, 1
    $region12: #{a_call__.4} parent=5 // pred_fallthru
      _
    %p207 = scmp.lt.s32.totalorder %s12, 2
    // Predicated region
    $region13: #{a_call__.4} parent=5 // pred_check
      %p208 = pneg %p207
    $region14: #{a_call__.4} parent=5 // pred_check_branch
      %210 = sbr.rel (%p208) target = $region16
    $region15: #{a_call__.4} parent=5 // pred_region
      // Predicated region
      $region17: #{a_call__.4} parent=15 // pred_check
        %p211 = pneg %p46
      $region18: #{a_call__.4} parent=15 // pred_check_branch
        %213 = sbr.rel (%p211) target = $region20
      $region19: #{a_call__.4} parent=15 // pred_region
        %s214 = smul.u32 2, %s19
        %p215 = scmp.lt.s32.totalorder %s20, 1
        %s216 = scalar_select %p215, %s20, 1
        %p217 = scmp.lt.s32.totalorder %s214, 1
        %s218 = scalar_select %p217, %s214, 1
        %s219 = smul.addr %s216, 2
        %s220 = sadd.s32 %s218, %s219
        %s221 = smul.addr %s220, 8
        %s222 = scalar_lea.vmem %s0, %s221
        %s223 = smul.u32 2, %s19
      $region20: #{a_call__.4} parent=15 // pred_fallthru
        _
      // Predicated region
      $region21: #{a_call__.4} parent=15 // pred_check
        %p224 = pneg %p74
      $region22: #{a_call__.4} parent=15 // pred_check_branch
        %226 = sbr.rel (%p224) target = $region24
      $region23: #{a_call__.4} parent=15 // pred_region
        %s227 = smul.u32 2, %s19
        %p228 = scmp.lt.s32.totalorder %s20, 1
        %s229 = scalar_select %p228, %s20, 1
        %p230 = scmp.lt.s32.totalorder %s227, 1
        %s231 = scalar_select %p230, %s227, 1
        %s232 = smul.addr %s229, 2
        %s233 = sadd.s32 %s231, %s232
        %s234 = smul.addr %s233, 8
        %s235 = scalar_lea.vmem %s1, %s234
        %s236 = smul.u32 2, %s19
      $region24: #{a_call__.4} parent=15 // pred_fallthru
        _
      // Predicated region
      $region25: #{a_call__.4} parent=15 // pred_check
        %p237 = pneg %p102
      $region26: #{a_call__.4} parent=15 // pred_check_branch
        %239 = sbr.rel (%p237) target = $region28
      $region27: #{a_call__.4} parent=15 // pred_region
        %s240 = smul.u32 2, %s19
        %p241 = scmp.lt.s32.totalorder %s20, 1
        %s242 = scalar_select %p241, %s20, 1
        %p243 = scmp.lt.s32.totalorder %s240, 1
        %s244 = scalar_select %p243, %s240, 1
        %s245 = smul.addr %s242, 2
        %s246 = sadd.s32 %s244, %s245
        %s247 = smul.addr %s246, 8
        %s248 = scalar_lea.vmem %s2, %s247
        %s249 = smul.u32 2, %s19
      $region28: #{a_call__.4} parent=15 // pred_fallthru
        _
      // Predicated region
      $region29: #{a_call__.4} parent=15 // pred_check
        %p250 = pneg %p130
      $region30: #{a_call__.4} parent=15 // pred_check_branch
        %252 = sbr.rel (%p250) target = $region32
      $region31: #{a_call__.4} parent=15 // pred_region
        %s253 = smul.u32 2, %s19
        %p254 = scmp.lt.s32.totalorder %s20, 1
        %s255 = scalar_select %p254, %s20, 1
        %p256 = scmp.lt.s32.totalorder %s253, 1
        %s257 = scalar_select %p256, %s253, 1
        %s258 = smul.addr %s255, 2
        %s259 = sadd.s32 %s257, %s258
        %s260 = smul.addr %s259, 8
        %s261 = scalar_lea.vmem %s3, %s260
        %s262 = smul.u32 2, %s19
      $region32: #{a_call__.4} parent=15 // pred_fallthru
        _
    $region16: #{a_call__.4} parent=5 // pred_fallthru
      _
    %p263 = scmp.le.s32.totalorder 1, %s12
    %p264 = scmp.lt.s32.totalorder %s12, 3
    %p265 = pnand %p263, %p264
    %p266 = pneg %p265
    // Predicated region
    $region33: #{a_call__.4} parent=5 // pred_check
      _
    $region34: #{a_call__.4} parent=5 // pred_check_branch
      %268 = sbr.rel (%p265) target = $region36
    $region35: #{a_call__.4} parent=5 // pred_region
      %s269 = ssub.s32 %s12, 1
      %s270 = smul.u32 2, %s21
      %p271 = scmp.lt.s32.totalorder %s22, 1
      %s272 = scalar_select %p271, %s22, 1
      %p273 = scmp.lt.s32.totalorder %s270, 1
      %s274 = scalar_select %p273, %s270, 1
      %s275 = smul.addr %s272, 2
      %s276 = sadd.s32 %s274, %s275
      %s277 = smul.addr %s276, 8
      %s278 = scalar_lea.vmem %s0, %s277
      %p279 = pneg %p52
      %p280 = pneg %p49
      %s281 = smul.u32 2, %s21
      %p282 = scmp.lt.s32.totalorder %s22, 1
      %s283 = scalar_select %p282, %s22, 1
      %p284 = scmp.lt.s32.totalorder %s281, 1
      %s285 = scalar_select %p284, %s281, 1
      %s286 = smul.addr %s283, 2
      %s287 = sadd.s32 %s285, %s286
      %s288 = smul.addr %s287, 8
      %s289 = scalar_lea.vmem %s1, %s288
      %p290 = pneg %p80
      %p291 = pneg %p77
      %s292 = smul.u32 2, %s21
      %p293 = scmp.lt.s32.totalorder %s22, 1
      %s294 = scalar_select %p293, %s22, 1
      %p295 = scmp.lt.s32.totalorder %s292, 1
      %s296 = scalar_select %p295, %s292, 1
      %s297 = smul.addr %s294, 2
      %s298 = sadd.s32 %s296, %s297
      %s299 = smul.addr %s298, 8
      %s300 = scalar_lea.vmem %s2, %s299
      %p301 = pneg %p108
      %p302 = pneg %p105
      %s303 = smul.u32 2, %s21
      %p304 = scmp.lt.s32.totalorder %s22, 1
      %s305 = scalar_select %p304, %s22, 1
      %p306 = scmp.lt.s32.totalorder %s303, 1
      %s307 = scalar_select %p306, %s303, 1
      %s308 = smul.addr %s305, 2
      %s309 = sadd.s32 %s307, %s308
      %s310 = smul.addr %s309, 8
      %s311 = scalar_lea.vmem %s3, %s310
      %p312 = pneg %p136
      %p313 = pneg %p133
      %p314 = pneg %p164
      %p315 = pneg %p161
      %s316 = smul.u32 2, %s21
      %p317 = scmp.lt.s32.totalorder %s22, 1
      %s318 = scalar_select %p317, %s22, 1
      %p319 = scmp.lt.s32.totalorder %s316, 1
      %s320 = scalar_select %p319, %s316, 1
      %s321 = smul.addr %s318, 2
      %s322 = sadd.s32 %s320, %s321
      %s323 = smul.addr %s322, 8
      %s324 = scalar_lea.vmem %s4, %s323
      %p325 = pneg %p192
      %p326 = pneg %p189
      %s327 = smul.u32 2, %s21
      %p328 = scmp.lt.s32.totalorder %s22, 1
      %s329 = scalar_select %p328, %s22, 1
      %p330 = scmp.lt.s32.totalorder %s327, 1
      %s331 = scalar_select %p330, %s327, 1
      %s332 = smul.addr %s329, 2
      %s333 = sadd.s32 %s331, %s332
      %s334 = smul.addr %s333, 8
      %s335 = scalar_lea.vmem %s5, %s334
      %s336 = smul.u32 2, %s21
      %p337 = scmp.lt.s32.totalorder %s22, 1
      %s338 = scalar_select %p337, %s22, 1
      %p339 = scmp.lt.s32.totalorder %s336, 1
      %s340 = scalar_select %p339, %s336, 1
      %s341 = smul.addr %s338, 2
      %s342 = sadd.s32 %s340, %s341
      %s343 = smul.addr %s342, 8
      %s344 = scalar_lea.vmem %s0, %s343
      %s345 = smul.u32 2, %s21
      %s346 = smul.u32 2, %s21
      %p347 = scmp.lt.s32.totalorder %s22, 1
      %s348 = scalar_select %p347, %s22, 1
      %p349 = scmp.lt.s32.totalorder %s346, 1
      %s350 = scalar_select %p349, %s346, 1
      %s351 = smul.addr %s348, 2
      %s352 = sadd.s32 %s350, %s351
      %s353 = smul.addr %s352, 8
      %s354 = scalar_lea.vmem %s1, %s353
      %s355 = smul.u32 2, %s21
      %s356 = smul.u32 2, %s21
      %p357 = scmp.lt.s32.totalorder %s22, 1
      %s358 = scalar_select %p357, %s22, 1
      %p359 = scmp.lt.s32.totalorder %s356, 1
      %s360 = scalar_select %p359, %s356, 1
      %s361 = smul.addr %s358, 2
      %s362 = sadd.s32 %s360, %s361
      %s363 = smul.addr %s362, 8
      %s364 = scalar_lea.vmem %s2, %s363
      %s365 = smul.u32 2, %s21
      %s366 = smul.u32 2, %s21
      %p367 = scmp.lt.s32.totalorder %s22, 1
      %s368 = scalar_select %p367, %s22, 1
      %p369 = scmp.lt.s32.totalorder %s366, 1
      %s370 = scalar_select %p369, %s366, 1
      %s371 = smul.addr %s368, 2
      %s372 = sadd.s32 %s370, %s371
      %s373 = smul.addr %s372, 8
      %s374 = scalar_lea.vmem %s3, %s373
      %s375 = smul.u32 2, %s21
      %s376 = smul.u32 2, %s21
      %p377 = scmp.lt.s32.totalorder %s22, 1
      %s378 = scalar_select %p377, %s22, 1
      %p379 = scmp.lt.s32.totalorder %s376, 1
      %s380 = scalar_select %p379, %s376, 1
      %s381 = smul.addr %s378, 2
      %s382 = sadd.s32 %s380, %s381
      %s383 = smul.addr %s382, 8
      %s384 = scalar_lea.vmem %s4, %s383
      %s385 = smul.u32 2, %s21
      %s386 = smul.u32 2, %s21
      %p387 = scmp.lt.s32.totalorder %s22, 1
      %s388 = scalar_select %p387, %s22, 1
      %p389 = scmp.lt.s32.totalorder %s386, 1
      %s390 = scalar_select %p389, %s386, 1
      %s391 = smul.addr %s388, 2
      %s392 = sadd.s32 %s390, %s391
      %s393 = smul.addr %s392, 8
      %s394 = scalar_lea.vmem %s5, %s393
      %s395 = smul.u32 2, %s21
      %v396 = vld [vmem:[%s344] sm:$0xff]
      %v397 = vld [vmem:[%s344 + $0x8] sm:$0xff]
      %v398 = vld [vmem:[%s354] sm:$0xff]
      %v399 = vld [vmem:[%s354 + $0x8] sm:$0xff]
      %v400 = vadd.f32 %v398, 1e-05
      %v401 = vadd.f32 %v399, 1e-05
      %v402 = vrcp.pop %v400
      %v403 = vmul.f32 %v400, %v402
      %v404 = vsub.f32 1.0, %v403
      %v405 = vmul.f32 %v402, %v404
      %v406 = vadd.f32 %v402, %v405
      %vm407 = vweird.f32 %v400
      %vm408 = vweird.f32 %v402
      %vm409 = vmor %vm407, %vm408
      %v410 = vsel %vm409, %v402, %v406
      %v411 = vand.u32 2147483647, %v400
      %vm412 = vcmp.eq.f32.partialorder %v411, 8.507059e+37
      %v413 = vand.u32 %v400, 2147483648
      %v414 = vor.u32 1.1754944e-38, %v413
      %v415 = vsel %vm412, %v414, %v410
      %v416 = vmul.f32 %v396, %v415
      %v417 = vrcp.pop %v401
      %v418 = vmul.f32 %v401, %v417
      %v419 = vsub.f32 1.0, %v418
      %v420 = vmul.f32 %v417, %v419
      %v421 = vadd.f32 %v417, %v420
      %vm422 = vweird.f32 %v401
      %vm423 = vweird.f32 %v417
      %vm424 = vmor %vm422, %vm423
      %v425 = vsel %vm424, %v417, %v421
      %v426 = vand.u32 2147483647, %v401
      %vm427 = vcmp.eq.f32.partialorder %v426, 8.507059e+37
      %v428 = vand.u32 %v401, 2147483648
      %v429 = vor.u32 1.1754944e-38, %v428
      %v430 = vsel %vm427, %v429, %v425
      %v431 = vmul.f32 %v397, %v430
      %v432 = vmax.f32 %v416, 1e-05
      %v433 = vmax.f32 %v431, 1e-05
      %434 = vst [vmem:[%s384] sm:$0xff] %v432
      %435 = vst [vmem:[%s384 + $0x8] sm:$0xff] %v433
      %v436 = vld [vmem:[%s364] sm:$0xff]
      %v437 = vld [vmem:[%s364 + $0x8] sm:$0xff]
      %v438 = vld [vmem:[%s374] sm:$0xff]
      %v439 = vld [vmem:[%s374 + $0x8] sm:$0xff]
      %v440 = vadd.f32 %v438, 1e-05
      %v441 = vadd.f32 %v439, 1e-05
      %v442 = vrcp.pop %v440
      %v443 = vmul.f32 %v440, %v442
      %v444 = vsub.f32 1.0, %v443
      %v445 = vmul.f32 %v442, %v444
      %v446 = vadd.f32 %v442, %v445
      %vm447 = vweird.f32 %v440
      %vm448 = vweird.f32 %v442
      %vm449 = vmor %vm447, %vm448
      %v450 = vsel %vm449, %v442, %v446
      %v451 = vand.u32 2147483647, %v440
      %vm452 = vcmp.eq.f32.partialorder %v451, 8.507059e+37
      %v453 = vand.u32 %v440, 2147483648
      %v454 = vor.u32 1.1754944e-38, %v453
      %v455 = vsel %vm452, %v454, %v450
      %v456 = vmul.f32 %v436, %v455
      %v457 = vrcp.pop %v441
      %v458 = vmul.f32 %v441, %v457
      %v459 = vsub.f32 1.0, %v458
      %v460 = vmul.f32 %v457, %v459
      %v461 = vadd.f32 %v457, %v460
      %vm462 = vweird.f32 %v441
      %vm463 = vweird.f32 %v457
      %vm464 = vmor %vm462, %vm463
      %v465 = vsel %vm464, %v457, %v461
      %v466 = vand.u32 2147483647, %v441
      %vm467 = vcmp.eq.f32.partialorder %v466, 8.507059e+37
      %v468 = vand.u32 %v441, 2147483648
      %v469 = vor.u32 1.1754944e-38, %v468
      %v470 = vsel %vm467, %v469, %v465
      %v471 = vmul.f32 %v437, %v470
      %v472 = vmax.f32 %v456, 1e-05
      %v473 = vmax.f32 %v471, 1e-05
      %474 = vst [vmem:[%s394] sm:$0xff] %v472
      %475 = vst [vmem:[%s394 + $0x8] sm:$0xff] %v473
      %s476 = smul.u32 2, %s21
      %p477 = scmp.lt.s32.totalorder %s22, 1
      %s478 = scalar_select %p477, %s22, 1
      %p479 = scmp.lt.s32.totalorder %s476, 1
      %s480 = scalar_select %p479, %s476, 1
      %s481 = smul.addr %s478, 2
      %s482 = sadd.s32 %s480, %s481
      %s483 = smul.addr %s482, 8
      %s484 = scalar_lea.vmem %s4, %s483
      %s485 = smul.u32 2, %s21
      %p486 = scmp.lt.s32.totalorder %s22, 1
      %s487 = scalar_select %p486, %s22, 1
      %p488 = scmp.lt.s32.totalorder %s485, 1
      %s489 = scalar_select %p488, %s485, 1
      %s490 = smul.addr %s487, 2
      %s491 = sadd.s32 %s489, %s490
      %s492 = smul.addr %s491, 8
      %s493 = scalar_lea.vmem %s5, %s492
      // Predicated region
      $region37: #{a_call__.4} parent=35 // pred_check
        %p494 = pneg %p161
      $region38: #{a_call__.4} parent=35 // pred_check_branch
        %496 = sbr.rel (%p494) target = $region40
      $region39: #{a_call__.4} parent=35 // pred_region
        %s497 = smul.u32 2, %s21
      $region40: #{a_call__.4} parent=35 // pred_fallthru
        _
      // Predicated region
      $region41: #{a_call__.4} parent=35 // pred_check
        %p498 = pneg %p189
      $region42: #{a_call__.4} parent=35 // pred_check_branch
        %500 = sbr.rel (%p498) target = $region44
      $region43: #{a_call__.4} parent=35 // pred_region
        %s501 = smul.u32 2, %s21
      $region44: #{a_call__.4} parent=35 // pred_fallthru
        _
    $region36: #{a_call__.4} parent=5 // pred_fallthru
      _
    %p502 = scmp.le.s32.totalorder 2, %s12
    // Predicated region
    $region45: #{a_call__.4} parent=5 // pred_check
      %p503 = pneg %p502
    $region46: #{a_call__.4} parent=5 // pred_check_branch
      %505 = sbr.rel (%p503) target = $region48
    $region47: #{a_call__.4} parent=5 // pred_region
      %s506 = ssub.s32 %s12, 2
      // Predicated region
      $region49: #{a_call__.4} parent=47 // pred_check
        %p507 = pneg %p167
      $region50: #{a_call__.4} parent=47 // pred_check_branch
        %509 = sbr.rel (%p507) target = $region52
      $region51: #{a_call__.4} parent=47 // pred_region
        %s510 = smul.u32 2, %s23
        %p511 = scmp.lt.s32.totalorder %s24, 1
        %s512 = scalar_select %p511, %s24, 1
        %p513 = scmp.lt.s32.totalorder %s510, 1
        %s514 = scalar_select %p513, %s510, 1
        %s515 = smul.addr %s512, 2
        %s516 = sadd.s32 %s514, %s515
        %s517 = smul.addr %s516, 8
        %s518 = scalar_lea.vmem %s4, %s517
      $region52: #{a_call__.4} parent=47 // pred_fallthru
        _
      // Predicated region
      $region53: #{a_call__.4} parent=47 // pred_check
        %p519 = pneg %p195
      $region54: #{a_call__.4} parent=47 // pred_check_branch
        %521 = sbr.rel (%p519) target = $region56
      $region55: #{a_call__.4} parent=47 // pred_region
        %s522 = smul.u32 2, %s23
        %p523 = scmp.lt.s32.totalorder %s24, 1
        %s524 = scalar_select %p523, %s24, 1
        %p525 = scmp.lt.s32.totalorder %s522, 1
        %s526 = scalar_select %p525, %s522, 1
        %s527 = smul.addr %s524, 2
        %s528 = sadd.s32 %s526, %s527
        %s529 = smul.addr %s528, 8
        %s530 = scalar_lea.vmem %s5, %s529
      $region56: #{a_call__.4} parent=47 // pred_fallthru
        _
    $region48: #{a_call__.4} parent=5 // pred_fallthru
      _
  $region6: #{a_call__.4} parent=0 // loop_footer
    %s16 = sadd.s32 1, %s12
  $region7: #{a_call__.4} parent=0 // loop_footer_branch
    %11 = sbr.rel target = $region3
  $region8: #{a_call__.4} parent=0 // loop_exit
    _

// kernel: a_call__.5
$region0: #{a_call__.5}
  #allocation0 [shape = 'u32[]', space=smem, size = 0x4, offset = 0x4, fixed_abs, tag = 'smem constant byte address 0x4 - core index']
  #allocation1 [shape = 'u32[72,128]{1,0:T(1,128)}', space=vmem, size = 0x9000, scoped, tag = 'internal scratch']
  %s0 = inlined_call_operand.vmem [shape: f32[2,16,128], index: 0, kind: input, shape index: {}]
  %s1 = inlined_call_operand.vmem [shape: f32[2,16,128], index: 1, kind: input, shape index: {}]
  %s2 = inlined_call_operand.vmem [shape: f32[2,16,128], index: 2, kind: input, shape index: {}]
  %s3 = inlined_call_operand.vmem [shape: f32[2,16,128], index: 3, kind: input, shape index: {}]
  %s4 = inlined_call_operand.vmem [shape: f32[16,128], index: 4, kind: input, shape index: {}]
  %s5 = inlined_call_operand.vmem [shape: f32[16,128], index: 5, kind: input, shape index: {}]
  %s6 = inlined_call_operand.vmem [shape: f32[16,128], index: 6, kind: input, shape index: {}]
  %s7 = inlined_call_operand.vmem [shape: f32[16,128], index: 7, kind: input, shape index: {}]
  %s8 = inlined_call_operand.vmem [shape: f32[2,16,128], index: 8, kind: output, shape index: {0}]
  %s9 = inlined_call_operand.vmem [shape: f32[2,16,128], index: 9, kind: output, shape index: {1}]
  %s10 = inlined_call_operand.vmem [shape: f32[2,16,128], index: 10, kind: output, shape index: {2}]
  %s11 = inlined_call_operand.vmem [shape: f32[2,16,128], index: 11, kind: output, shape index: {3}]
  %12 = xla_tuple %s8, %s9, %s10, %s11
  %s13 = sld [smem:[#allocation0]]
  $region89: #{a_call__.5} parent=0
    _
  %s15 = ssub.s32 1, %s13
  %s16 = scalar_select 0, %s15, %s13
  loop: start=0, step=1, limit=4
  $region2: #{a_call__.5} parent=0 // loop_pre_header
    _
  $region3: #{a_call__.5} parent=0 // loop_header
    %s18 = sphi 0, %s22
    %p19 = scmp.ge.s32.totalorder %s18, 4
    %s25 = sphi 0, %s37
    %s26 = sphi 0, %s33
    %s27 = sphi 0, %s25
    %s28 = sphi 0, %s26
    %s29 = sphi 0, %s27
    %s30 = sphi 0, %s28
    %s42 = sphi 0, %s44
    %s45 = sphi 0, %s42
    %s46 = sphi 0, %s45
    %s62 = sphi 0, %s46
    %s70 = sphi 0, %s72
    %s73 = sphi 0, %s70
    %s74 = sphi 0, %s73
    %s90 = sphi 0, %s74
    %s98 = sphi 0, %s100
    %s101 = sphi 0, %s98
    %s102 = sphi 0, %s101
    %s118 = sphi 0, %s102
    %s126 = sphi 0, %s128
    %s129 = sphi 0, %s126
    %s130 = sphi 0, %s129
    %s146 = sphi 0, %s130
    %s152 = sphi 0, %s154
    %s155 = sphi 0, %s152
    %s156 = sphi 0, %s155
    %s172 = sphi 0, %s156
    %s178 = sphi 0, %s180
    %s181 = sphi 0, %s178
    %s182 = sphi 0, %s181
    %s198 = sphi 0, %s182
    %s204 = sphi 0, %s206
    %s207 = sphi 0, %s204
    %s208 = sphi 0, %s207
    %s224 = sphi 0, %s208
    %s230 = sphi 0, %s232
    %s233 = sphi 0, %s230
    %s234 = sphi 0, %s233
    %s250 = sphi 0, %s234
    %s258 = sphi 0, %s260
    %s261 = sphi 0, %s258
    %s262 = sphi 0, %s261
    %s278 = sphi 0, %s262
    %s286 = sphi 0, %s288
    %s289 = sphi 0, %s286
    %s290 = sphi 0, %s289
    %s306 = sphi 0, %s290
    %s314 = sphi 0, %s316
    %s317 = sphi 0, %s314
    %s318 = sphi 0, %s317
    %s334 = sphi 0, %s318
    %s342 = sphi 0, %s344
    %s345 = sphi 0, %s342
    %s346 = sphi 0, %s345
    %s362 = sphi 0, %s346
  $region4: #{a_call__.5} parent=0 // loop_header_branch
    %21 = sbr.rel (%p19) target = $region8
  $region5: #{a_call__.5} parent=0 // loop_body
    %s23 = ssub.s32 %s18, 1
    %s24 = ssub.s32 %s18, 2
    %s31 = sadd.s32 1, %s26
    %p32 = scmp.ge.s32.totalorder %s31, 2
    %s33 = scalar_select %p32, 0, %s31
    %s34 = sadd.s32 1, %s25
    %s35 = scalar_select %p32, %s34, %s25
    %p36 = scmp.ge.s32.totalorder %s35, 1
    %s37 = scalar_select %p36, 0, %s35
    %s38 = ssub.s32 %s26, %s33
    %s39 = ssub.s32 %s25, %s37
    %s40 = sor.u32 %s38, %s39
    %p41 = scmp.eq.s32.totalorder %s40, 0
    %s43 = sadd.s32 %s42, 1
    %s44 = scalar_select %p41, %s42, %s43
    %p47 = pneg %p41
    %p48 = scmp.eq.s32.totalorder %s18, 1
    %p49 = por %p47, %p48
    %p50 = scmp.ne.s32.totalorder %s42, %s45
    %p51 = scmp.eq.s32.totalorder %s18, 0
    %p52 = por %p50, %p51
    %p53 = scmp.ne.s32.totalorder %s42, %s45
    %p54 = scmp.eq.s32.totalorder %s23, 1
    %p55 = por %p53, %p54
    %p56 = scmp.ne.s32.totalorder %s45, %s46
    %p57 = scmp.eq.s32.totalorder %s23, 0
    %p58 = por %p56, %p57
    %p59 = scmp.ne.s32.totalorder %s45, %s46
    %p60 = scmp.eq.s32.totalorder %s24, 1
    %p61 = por %p59, %p60
    %p63 = scmp.ne.s32.totalorder %s46, %s62
    %p64 = scmp.eq.s32.totalorder %s24, 0
    %p65 = por %p63, %p64
    %s66 = ssub.s32 %s26, %s33
    %s67 = ssub.s32 %s25, %s37
    %s68 = sor.u32 %s66, %s67
    %p69 = scmp.eq.s32.totalorder %s68, 0
    %s71 = sadd.s32 %s70, 1
    %s72 = scalar_select %p69, %s70, %s71
    %p75 = pneg %p69
    %p76 = scmp.eq.s32.totalorder %s18, 1
    %p77 = por %p75, %p76
    %p78 = scmp.ne.s32.totalorder %s70, %s73
    %p79 = scmp.eq.s32.totalorder %s18, 0
    %p80 = por %p78, %p79
    %p81 = scmp.ne.s32.totalorder %s70, %s73
    %p82 = scmp.eq.s32.totalorder %s23, 1
    %p83 = por %p81, %p82
    %p84 = scmp.ne.s32.totalorder %s73, %s74
    %p85 = scmp.eq.s32.totalorder %s23, 0
    %p86 = por %p84, %p85
    %p87 = scmp.ne.s32.totalorder %s73, %s74
    %p88 = scmp.eq.s32.totalorder %s24, 1
    %p89 = por %p87, %p88
    %p91 = scmp.ne.s32.totalorder %s74, %s90
    %p92 = scmp.eq.s32.totalorder %s24, 0
    %p93 = por %p91, %p92
    %s94 = ssub.s32 %s26, %s33
    %s95 = ssub.s32 %s25, %s37
    %s96 = sor.u32 %s94, %s95
    %p97 = scmp.eq.s32.totalorder %s96, 0
    %s99 = sadd.s32 %s98, 1
    %s100 = scalar_select %p97, %s98, %s99
    %p103 = pneg %p97
    %p104 = scmp.eq.s32.totalorder %s18, 1
    %p105 = por %p103, %p104
    %p106 = scmp.ne.s32.totalorder %s98, %s101
    %p107 = scmp.eq.s32.totalorder %s18, 0
    %p108 = por %p106, %p107
    %p109 = scmp.ne.s32.totalorder %s98, %s101
    %p110 = scmp.eq.s32.totalorder %s23, 1
    %p111 = por %p109, %p110
    %p112 = scmp.ne.s32.totalorder %s101, %s102
    %p113 = scmp.eq.s32.totalorder %s23, 0
    %p114 = por %p112, %p113
    %p115 = scmp.ne.s32.totalorder %s101, %s102
    %p116 = scmp.eq.s32.totalorder %s24, 1
    %p117 = por %p115, %p116
    %p119 = scmp.ne.s32.totalorder %s102, %s118
    %p120 = scmp.eq.s32.totalorder %s24, 0
    %p121 = por %p119, %p120
    %s122 = ssub.s32 %s26, %s33
    %s123 = ssub.s32 %s25, %s37
    %s124 = sor.u32 %s122, %s123
    %p125 = scmp.eq.s32.totalorder %s124, 0
    %s127 = sadd.s32 %s126, 1
    %s128 = scalar_select %p125, %s126, %s127
    %p131 = pneg %p125
    %p132 = scmp.eq.s32.totalorder %s18, 1
    %p133 = por %p131, %p132
    %p134 = scmp.ne.s32.totalorder %s126, %s129
    %p135 = scmp.eq.s32.totalorder %s18, 0
    %p136 = por %p134, %p135
    %p137 = scmp.ne.s32.totalorder %s126, %s129
    %p138 = scmp.eq.s32.totalorder %s23, 1
    %p139 = por %p137, %p138
    %p140 = scmp.ne.s32.totalorder %s129, %s130
    %p141 = scmp.eq.s32.totalorder %s23, 0
    %p142 = por %p140, %p141
    %p143 = scmp.ne.s32.totalorder %s129, %s130
    %p144 = scmp.eq.s32.totalorder %s24, 1
    %p145 = por %p143, %p144
    %p147 = scmp.ne.s32.totalorder %s130, %s146
    %p148 = scmp.eq.s32.totalorder %s24, 0
    %p149 = por %p147, %p148
    %s150 = ssub.s32 %s25, %s37
    %p151 = scmp.eq.s32.totalorder %s150, 0
    %s153 = sadd.s32 %s152, 1
    %s154 = scalar_select %p151, %s152, %s153
    %p157 = pneg %p151
    %p158 = scmp.eq.s32.totalorder %s18, 1
    %p159 = por %p157, %p158
    %p160 = scmp.ne.s32.totalorder %s152, %s155
    %p161 = scmp.eq.s32.totalorder %s18, 0
    %p162 = por %p160, %p161
    %p163 = scmp.ne.s32.totalorder %s152, %s155
    %p164 = scmp.eq.s32.totalorder %s23, 1
    %p165 = por %p163, %p164
    %p166 = scmp.ne.s32.totalorder %s155, %s156
    %p167 = scmp.eq.s32.totalorder %s23, 0
    %p168 = por %p166, %p167
    %p169 = scmp.ne.s32.totalorder %s155, %s156
    %p170 = scmp.eq.s32.totalorder %s24, 1
    %p171 = por %p169, %p170
    %p173 = scmp.ne.s32.totalorder %s156, %s172
    %p174 = scmp.eq.s32.totalorder %s24, 0
    %p175 = por %p173, %p174
    %s176 = ssub.s32 %s25, %s37
    %p177 = scmp.eq.s32.totalorder %s176, 0
    %s179 = sadd.s32 %s178, 1
    %s180 = scalar_select %p177, %s178, %s179
    %p183 = pneg %p177
    %p184 = scmp.eq.s32.totalorder %s18, 1
    %p185 = por %p183, %p184
    %p186 = scmp.ne.s32.totalorder %s178, %s181
    %p187 = scmp.eq.s32.totalorder %s18, 0
    %p188 = por %p186, %p187
    %p189 = scmp.ne.s32.totalorder %s178, %s181
    %p190 = scmp.eq.s32.totalorder %s23, 1
    %p191 = por %p189, %p190
    %p192 = scmp.ne.s32.totalorder %s181, %s182
    %p193 = scmp.eq.s32.totalorder %s23, 0
    %p194 = por %p192, %p193
    %p195 = scmp.ne.s32.totalorder %s181, %s182
    %p196 = scmp.eq.s32.totalorder %s24, 1
    %p197 = por %p195, %p196
    %p199 = scmp.ne.s32.totalorder %s182, %s198
    %p200 = scmp.eq.s32.totalorder %s24, 0
    %p201 = por %p199, %p200
    %s202 = ssub.s32 %s25, %s37
    %p203 = scmp.eq.s32.totalorder %s202, 0
    %s205 = sadd.s32 %s204, 1
    %s206 = scalar_select %p203, %s204, %s205
    %p209 = pneg %p203
    %p210 = scmp.eq.s32.totalorder %s18, 1
    %p211 = por %p209, %p210
    %p212 = scmp.ne.s32.totalorder %s204, %s207
    %p213 = scmp.eq.s32.totalorder %s18, 0
    %p214 = por %p212, %p213
    %p215 = scmp.ne.s32.totalorder %s204, %s207
    %p216 = scmp.eq.s32.totalorder %s23, 1
    %p217 = por %p215, %p216
    %p218 = scmp.ne.s32.totalorder %s207, %s208
    %p219 = scmp.eq.s32.totalorder %s23, 0
    %p220 = por %p218, %p219
    %p221 = scmp.ne.s32.totalorder %s207, %s208
    %p222 = scmp.eq.s32.totalorder %s24, 1
    %p223 = por %p221, %p222
    %p225 = scmp.ne.s32.totalorder %s208, %s224
    %p226 = scmp.eq.s32.totalorder %s24, 0
    %p227 = por %p225, %p226
    %s228 = ssub.s32 %s25, %s37
    %p229 = scmp.eq.s32.totalorder %s228, 0
    %s231 = sadd.s32 %s230, 1
    %s232 = scalar_select %p229, %s230, %s231
    %p235 = pneg %p229
    %p236 = scmp.eq.s32.totalorder %s18, 1
    %p237 = por %p235, %p236
    %p238 = scmp.ne.s32.totalorder %s230, %s233
    %p239 = scmp.eq.s32.totalorder %s18, 0
    %p240 = por %p238, %p239
    %p241 = scmp.ne.s32.totalorder %s230, %s233
    %p242 = scmp.eq.s32.totalorder %s23, 1
    %p243 = por %p241, %p242
    %p244 = scmp.ne.s32.totalorder %s233, %s234
    %p245 = scmp.eq.s32.totalorder %s23, 0
    %p246 = por %p244, %p245
    %p247 = scmp.ne.s32.totalorder %s233, %s234
    %p248 = scmp.eq.s32.totalorder %s24, 1
    %p249 = por %p247, %p248
    %p251 = scmp.ne.s32.totalorder %s234, %s250
    %p252 = scmp.eq.s32.totalorder %s24, 0
    %p253 = por %p251, %p252
    %s254 = ssub.s32 %s26, %s33
    %s255 = ssub.s32 %s25, %s37
    %s256 = sor.u32 %s254, %s255
    %p257 = scmp.eq.s32.totalorder %s256, 0
    %s259 = sadd.s32 %s258, 1
    %s260 = scalar_select %p257, %s258, %s259
    %p263 = pneg %p257
    %p264 = scmp.eq.s32.totalorder %s18, 1
    %p265 = por %p263, %p264
    %p266 = scmp.ne.s32.totalorder %s258, %s261
    %p267 = scmp.eq.s32.totalorder %s18, 0
    %p268 = por %p266, %p267
    %p269 = scmp.ne.s32.totalorder %s258, %s261
    %p270 = scmp.eq.s32.totalorder %s23, 1
    %p271 = por %p269, %p270
    %p272 = scmp.ne.s32.totalorder %s261, %s262
    %p273 = scmp.eq.s32.totalorder %s23, 0
    %p274 = por %p272, %p273
    %p275 = scmp.ne.s32.totalorder %s261, %s262
    %p276 = scmp.eq.s32.totalorder %s24, 1
    %p277 = por %p275, %p276
    %p279 = scmp.ne.s32.totalorder %s262, %s278
    %p280 = scmp.eq.s32.totalorder %s24, 0
    %p281 = por %p279, %p280
    %s282 = ssub.s32 %s26, %s33
    %s283 = ssub.s32 %s25, %s37
    %s284 = sor.u32 %s282, %s283
    %p285 = scmp.eq.s32.totalorder %s284, 0
    %s287 = sadd.s32 %s286, 1
    %s288 = scalar_select %p285, %s286, %s287
    %p291 = pneg %p285
    %p292 = scmp.eq.s32.totalorder %s18, 1
    %p293 = por %p291, %p292
    %p294 = scmp.ne.s32.totalorder %s286, %s289
    %p295 = scmp.eq.s32.totalorder %s18, 0
    %p296 = por %p294, %p295
    %p297 = scmp.ne.s32.totalorder %s286, %s289
    %p298 = scmp.eq.s32.totalorder %s23, 1
    %p299 = por %p297, %p298
    %p300 = scmp.ne.s32.totalorder %s289, %s290
    %p301 = scmp.eq.s32.totalorder %s23, 0
    %p302 = por %p300, %p301
    %p303 = scmp.ne.s32.totalorder %s289, %s290
    %p304 = scmp.eq.s32.totalorder %s24, 1
    %p305 = por %p303, %p304
    %p307 = scmp.ne.s32.totalorder %s290, %s306
    %p308 = scmp.eq.s32.totalorder %s24, 0
    %p309 = por %p307, %p308
    %s310 = ssub.s32 %s26, %s33
    %s311 = ssub.s32 %s25, %s37
    %s312 = sor.u32 %s310, %s311
    %p313 = scmp.eq.s32.totalorder %s312, 0
    %s315 = sadd.s32 %s314, 1
    %s316 = scalar_select %p313, %s314, %s315
    %p319 = pneg %p313
    %p320 = scmp.eq.s32.totalorder %s18, 1
    %p321 = por %p319, %p320
    %p322 = scmp.ne.s32.totalorder %s314, %s317
    %p323 = scmp.eq.s32.totalorder %s18, 0
    %p324 = por %p322, %p323
    %p325 = scmp.ne.s32.totalorder %s314, %s317
    %p326 = scmp.eq.s32.totalorder %s23, 1
    %p327 = por %p325, %p326
    %p328 = scmp.ne.s32.totalorder %s317, %s318
    %p329 = scmp.eq.s32.totalorder %s23, 0
    %p330 = por %p328, %p329
    %p331 = scmp.ne.s32.totalorder %s317, %s318
    %p332 = scmp.eq.s32.totalorder %s24, 1
    %p333 = por %p331, %p332
    %p335 = scmp.ne.s32.totalorder %s318, %s334
    %p336 = scmp.eq.s32.totalorder %s24, 0
    %p337 = por %p335, %p336
    %s338 = ssub.s32 %s26, %s33
    %s339 = ssub.s32 %s25, %s37
    %s340 = sor.u32 %s338, %s339
    %p341 = scmp.eq.s32.totalorder %s340, 0
    %s343 = sadd.s32 %s342, 1
    %s344 = scalar_select %p341, %s342, %s343
    %p347 = pneg %p341
    %p348 = scmp.eq.s32.totalorder %s18, 1
    %p349 = por %p347, %p348
    %p350 = scmp.ne.s32.totalorder %s342, %s345
    %p351 = scmp.eq.s32.totalorder %s18, 0
    %p352 = por %p350, %p351
    %p353 = scmp.ne.s32.totalorder %s342, %s345
    %p354 = scmp.eq.s32.totalorder %s23, 1
    %p355 = por %p353, %p354
    %p356 = scmp.ne.s32.totalorder %s345, %s346
    %p357 = scmp.eq.s32.totalorder %s23, 0
    %p358 = por %p356, %p357
    %p359 = scmp.ne.s32.totalorder %s345, %s346
    %p360 = scmp.eq.s32.totalorder %s24, 1
    %p361 = por %p359, %p360
    %p363 = scmp.ne.s32.totalorder %s346, %s362
    %p364 = scmp.eq.s32.totalorder %s24, 0
    %p365 = por %p363, %p364
    %p366 = scmp.le.s32.totalorder 1, %s18
    %p367 = scmp.lt.s32.totalorder %s18, 3
    %p368 = pnand %p366, %p367
    %p369 = pneg %p368
    // Predicated region
    $region9: #{a_call__.5} parent=5 // pred_check
      _
    $region10: #{a_call__.5} parent=5 // pred_check_branch
      %371 = sbr.rel (%p368) target = $region12
    $region11: #{a_call__.5} parent=5 // pred_region
      %s372 = ssub.s32 %s18, 1
      // Predicated region
      $region13: #{a_call__.5} parent=11 // pred_check
        %p373 = pneg %p168
      $region14: #{a_call__.5} parent=11 // pred_check_branch
        %375 = sbr.rel (%p373) target = $region16
      $region15: #{a_call__.5} parent=11 // pred_region
        %s376 = smul.u32 2, %s27
        %p377 = scmp.lt.s32.totalorder %s376, 1
        %s378 = scalar_select %p377, %s376, 1
        %s379 = smul.addr %s378, 8
        %s380 = scalar_lea.vmem %s4, %s379
        %s381 = smul.u32 2, %s27
      $region16: #{a_call__.5} parent=11 // pred_fallthru
        _
      // Predicated region
      $region17: #{a_call__.5} parent=11 // pred_check
        %p382 = pneg %p194
      $region18: #{a_call__.5} parent=11 // pred_check_branch
        %384 = sbr.rel (%p382) target = $region20
      $region19: #{a_call__.5} parent=11 // pred_region
        %s385 = smul.u32 2, %s27
        %p386 = scmp.lt.s32.totalorder %s385, 1
        %s387 = scalar_select %p386, %s385, 1
        %s388 = smul.addr %s387, 8
        %s389 = scalar_lea.vmem %s5, %s388
        %s390 = smul.u32 2, %s27
      $region20: #{a_call__.5} parent=11 // pred_fallthru
        _
      // Predicated region
      $region21: #{a_call__.5} parent=11 // pred_check
        %p391 = pneg %p220
      $region22: #{a_call__.5} parent=11 // pred_check_branch
        %393 = sbr.rel (%p391) target = $region24
      $region23: #{a_call__.5} parent=11 // pred_region
        %s394 = smul.u32 2, %s27
        %p395 = scmp.lt.s32.totalorder %s394, 1
        %s396 = scalar_select %p395, %s394, 1
        %s397 = smul.addr %s396, 8
        %s398 = scalar_lea.vmem %s6, %s397
        %s399 = smul.u32 2, %s27
      $region24: #{a_call__.5} parent=11 // pred_fallthru
        _
      // Predicated region
      $region25: #{a_call__.5} parent=11 // pred_check
        %p400 = pneg %p246
      $region26: #{a_call__.5} parent=11 // pred_check_branch
        %402 = sbr.rel (%p400) target = $region28
      $region27: #{a_call__.5} parent=11 // pred_region
        %s403 = smul.u32 2, %s27
        %p404 = scmp.lt.s32.totalorder %s403, 1
        %s405 = scalar_select %p404, %s403, 1
        %s406 = smul.addr %s405, 8
        %s407 = scalar_lea.vmem %s7, %s406
        %s408 = smul.u32 2, %s27
      $region28: #{a_call__.5} parent=11 // pred_fallthru
        _
    $region12: #{a_call__.5} parent=5 // pred_fallthru
      _
    %p409 = scmp.lt.s32.totalorder %s18, 2
    // Predicated region
    $region29: #{a_call__.5} parent=5 // pred_check
      %p410 = pneg %p409
    $region30: #{a_call__.5} parent=5 // pred_check_branch
      %412 = sbr.rel (%p410) target = $region32
    $region31: #{a_call__.5} parent=5 // pred_region
      // Predicated region
      $region33: #{a_call__.5} parent=31 // pred_check
        %p413 = pneg %p52
      $region34: #{a_call__.5} parent=31 // pred_check_branch
        %415 = sbr.rel (%p413) target = $region36
      $region35: #{a_call__.5} parent=31 // pred_region
        %s416 = smul.u32 2, %s25
        %p417 = scmp.lt.s32.totalorder %s26, 1
        %s418 = scalar_select %p417, %s26, 1
        %p419 = scmp.lt.s32.totalorder %s416, 1
        %s420 = scalar_select %p419, %s416, 1
        %s421 = smul.addr %s418, 2
        %s422 = sadd.s32 %s420, %s421
        %s423 = smul.addr %s422, 8
        %s424 = scalar_lea.vmem %s0, %s423
        %s425 = smul.u32 2, %s25
      $region36: #{a_call__.5} parent=31 // pred_fallthru
        _
      // Predicated region
      $region37: #{a_call__.5} parent=31 // pred_check
        %p426 = pneg %p80
      $region38: #{a_call__.5} parent=31 // pred_check_branch
        %428 = sbr.rel (%p426) target = $region40
      $region39: #{a_call__.5} parent=31 // pred_region
        %s429 = smul.u32 2, %s25
        %p430 = scmp.lt.s32.totalorder %s26, 1
        %s431 = scalar_select %p430, %s26, 1
        %p432 = scmp.lt.s32.totalorder %s429, 1
        %s433 = scalar_select %p432, %s429, 1
        %s434 = smul.addr %s431, 2
        %s435 = sadd.s32 %s433, %s434
        %s436 = smul.addr %s435, 8
        %s437 = scalar_lea.vmem %s1, %s436
        %s438 = smul.u32 2, %s25
      $region40: #{a_call__.5} parent=31 // pred_fallthru
        _
      // Predicated region
      $region41: #{a_call__.5} parent=31 // pred_check
        %p439 = pneg %p108
      $region42: #{a_call__.5} parent=31 // pred_check_branch
        %441 = sbr.rel (%p439) target = $region44
      $region43: #{a_call__.5} parent=31 // pred_region
        %s442 = smul.u32 2, %s25
        %p443 = scmp.lt.s32.totalorder %s26, 1
        %s444 = scalar_select %p443, %s26, 1
        %p445 = scmp.lt.s32.totalorder %s442, 1
        %s446 = scalar_select %p445, %s442, 1
        %s447 = smul.addr %s444, 2
        %s448 = sadd.s32 %s446, %s447
        %s449 = smul.addr %s448, 8
        %s450 = scalar_lea.vmem %s2, %s449
        %s451 = smul.u32 2, %s25
      $region44: #{a_call__.5} parent=31 // pred_fallthru
        _
      // Predicated region
      $region45: #{a_call__.5} parent=31 // pred_check
        %p452 = pneg %p136
      $region46: #{a_call__.5} parent=31 // pred_check_branch
        %454 = sbr.rel (%p452) target = $region48
      $region47: #{a_call__.5} parent=31 // pred_region
        %s455 = smul.u32 2, %s25
        %p456 = scmp.lt.s32.totalorder %s26, 1
        %s457 = scalar_select %p456, %s26, 1
        %p458 = scmp.lt.s32.totalorder %s455, 1
        %s459 = scalar_select %p458, %s455, 1
        %s460 = smul.addr %s457, 2
        %s461 = sadd.s32 %s459, %s460
        %s462 = smul.addr %s461, 8
        %s463 = scalar_lea.vmem %s3, %s462
        %s464 = smul.u32 2, %s25
      $region48: #{a_call__.5} parent=31 // pred_fallthru
        _
    $region32: #{a_call__.5} parent=5 // pred_fallthru
      _
    %p465 = scmp.le.s32.totalorder 1, %s18
    %p466 = scmp.lt.s32.totalorder %s18, 3
    %p467 = pnand %p465, %p466
    %p468 = pneg %p467
    // Predicated region
    $region49: #{a_call__.5} parent=5 // pred_check
      _
    $region50: #{a_call__.5} parent=5 // pred_check_branch
      %470 = sbr.rel (%p467) target = $region52
    $region51: #{a_call__.5} parent=5 // pred_region
      %s471 = ssub.s32 %s18, 1
      %s472 = smul.u32 2, %s27
      %p473 = scmp.lt.s32.totalorder %s28, 1
      %s474 = scalar_select %p473, %s28, 1
      %p475 = scmp.lt.s32.totalorder %s472, 1
      %s476 = scalar_select %p475, %s472, 1
      %s477 = smul.addr %s474, 2
      %s478 = sadd.s32 %s476, %s477
      %s479 = smul.addr %s478, 8
      %s480 = scalar_lea.vmem %s0, %s479
      %p481 = pneg %p58
      %p482 = pneg %p55
      %s483 = smul.u32 2, %s27
      %p484 = scmp.lt.s32.totalorder %s28, 1
      %s485 = scalar_select %p484, %s28, 1
      %p486 = scmp.lt.s32.totalorder %s483, 1
      %s487 = scalar_select %p486, %s483, 1
      %s488 = smul.addr %s485, 2
      %s489 = sadd.s32 %s487, %s488
      %s490 = smul.addr %s489, 8
      %s491 = scalar_lea.vmem %s1, %s490
      %p492 = pneg %p86
      %p493 = pneg %p83
      %s494 = smul.u32 2, %s27
      %p495 = scmp.lt.s32.totalorder %s28, 1
      %s496 = scalar_select %p495, %s28, 1
      %p497 = scmp.lt.s32.totalorder %s494, 1
      %s498 = scalar_select %p497, %s494, 1
      %s499 = smul.addr %s496, 2
      %s500 = sadd.s32 %s498, %s499
      %s501 = smul.addr %s500, 8
      %s502 = scalar_lea.vmem %s2, %s501
      %p503 = pneg %p114
      %p504 = pneg %p111
      %s505 = smul.u32 2, %s27
      %p506 = scmp.lt.s32.totalorder %s28, 1
      %s507 = scalar_select %p506, %s28, 1
      %p508 = scmp.lt.s32.totalorder %s505, 1
      %s509 = scalar_select %p508, %s505, 1
      %s510 = smul.addr %s507, 2
      %s511 = sadd.s32 %s509, %s510
      %s512 = smul.addr %s511, 8
      %s513 = scalar_lea.vmem %s3, %s512
      %p514 = pneg %p142
      %p515 = pneg %p139
      %s516 = smul.u32 2, %s27
      %p517 = scmp.lt.s32.totalorder %s516, 1
      %s518 = scalar_select %p517, %s516, 1
      %s519 = smul.addr %s518, 8
      %s520 = scalar_lea.vmem %s4, %s519
      %p521 = pneg %p168
      %p522 = pneg %p165
      %s523 = smul.u32 2, %s27
      %p524 = scmp.lt.s32.totalorder %s523, 1
      %s525 = scalar_select %p524, %s523, 1
      %s526 = smul.addr %s525, 8
      %s527 = scalar_lea.vmem %s5, %s526
      %p528 = pneg %p194
      %p529 = pneg %p191
      %s530 = smul.u32 2, %s27
      %p531 = scmp.lt.s32.totalorder %s530, 1
      %s532 = scalar_select %p531, %s530, 1
      %s533 = smul.addr %s532, 8
      %s534 = scalar_lea.vmem %s6, %s533
      %p535 = pneg %p220
      %p536 = pneg %p217
      %s537 = smul.u32 2, %s27
      %p538 = scmp.lt.s32.totalorder %s537, 1
      %s539 = scalar_select %p538, %s537, 1
      %s540 = smul.addr %s539, 8
      %s541 = scalar_lea.vmem %s7, %s540
      %p542 = pneg %p246
      %p543 = pneg %p243
      %p544 = pneg %p274
      %p545 = pneg %p271
      %s546 = smul.u32 2, %s27
      %p547 = scmp.lt.s32.totalorder %s28, 1
      %s548 = scalar_select %p547, %s28, 1
      %p549 = scmp.lt.s32.totalorder %s546, 1
      %s550 = scalar_select %p549, %s546, 1
      %s551 = smul.addr %s548, 2
      %s552 = sadd.s32 %s550, %s551
      %s553 = smul.addr %s552, 8
      %s554 = scalar_lea.vmem %s8, %s553
      %p555 = pneg %p302
      %p556 = pneg %p299
      %s557 = smul.u32 2, %s27
      %p558 = scmp.lt.s32.totalorder %s28, 1
      %s559 = scalar_select %p558, %s28, 1
      %p560 = scmp.lt.s32.totalorder %s557, 1
      %s561 = scalar_select %p560, %s557, 1
      %s562 = smul.addr %s559, 2
      %s563 = sadd.s32 %s561, %s562
      %s564 = smul.addr %s563, 8
      %s565 = scalar_lea.vmem %s9, %s564
      %p566 = pneg %p330
      %p567 = pneg %p327
      %s568 = smul.u32 2, %s27
      %p569 = scmp.lt.s32.totalorder %s28, 1
      %s570 = scalar_select %p569, %s28, 1
      %p571 = scmp.lt.s32.totalorder %s568, 1
      %s572 = scalar_select %p571, %s568, 1
      %s573 = smul.addr %s570, 2
      %s574 = sadd.s32 %s572, %s573
      %s575 = smul.addr %s574, 8
      %s576 = scalar_lea.vmem %s10, %s575
      %p577 = pneg %p358
      %p578 = pneg %p355
      %s579 = smul.u32 2, %s27
      %p580 = scmp.lt.s32.totalorder %s28, 1
      %s581 = scalar_select %p580, %s28, 1
      %p582 = scmp.lt.s32.totalorder %s579, 1
      %s583 = scalar_select %p582, %s579, 1
      %s584 = smul.addr %s581, 2
      %s585 = sadd.s32 %s583, %s584
      %s586 = smul.addr %s585, 8
      %s587 = scalar_lea.vmem %s11, %s586
      %s588 = smul.u32 2, %s27
      %p589 = scmp.lt.s32.totalorder %s28, 1
      %s590 = scalar_select %p589, %s28, 1
      %p591 = scmp.lt.s32.totalorder %s588, 1
      %s592 = scalar_select %p591, %s588, 1
      %s593 = smul.addr %s590, 2
      %s594 = sadd.s32 %s592, %s593
      %s595 = smul.addr %s594, 8
      %s596 = scalar_lea.vmem %s0, %s595
      %s597 = smul.u32 2, %s27
      %s598 = smul.u32 2, %s27
      %p599 = scmp.lt.s32.totalorder %s28, 1
      %s600 = scalar_select %p599, %s28, 1
      %p601 = scmp.lt.s32.totalorder %s598, 1
      %s602 = scalar_select %p601, %s598, 1
      %s603 = smul.addr %s600, 2
      %s604 = sadd.s32 %s602, %s603
      %s605 = smul.addr %s604, 8
      %s606 = scalar_lea.vmem %s1, %s605
      %s607 = smul.u32 2, %s27
      %s608 = smul.u32 2, %s27
      %p609 = scmp.lt.s32.totalorder %s28, 1
      %s610 = scalar_select %p609, %s28, 1
      %p611 = scmp.lt.s32.totalorder %s608, 1
      %s612 = scalar_select %p611, %s608, 1
      %s613 = smul.addr %s610, 2
      %s614 = sadd.s32 %s612, %s613
      %s615 = smul.addr %s614, 8
      %s616 = scalar_lea.vmem %s2, %s615
      %s617 = smul.u32 2, %s27
      %s618 = smul.u32 2, %s27
      %p619 = scmp.lt.s32.totalorder %s28, 1
      %s620 = scalar_select %p619, %s28, 1
      %p621 = scmp.lt.s32.totalorder %s618, 1
      %s622 = scalar_select %p621, %s618, 1
      %s623 = smul.addr %s620, 2
      %s624 = sadd.s32 %s622, %s623
      %s625 = smul.addr %s624, 8
      %s626 = scalar_lea.vmem %s3, %s625
      %s627 = smul.u32 2, %s27
      %s628 = smul.u32 2, %s27
      %p629 = scmp.lt.s32.totalorder %s628, 1
      %s630 = scalar_select %p629, %s628, 1
      %s631 = smul.addr %s630, 8
      %s632 = scalar_lea.vmem %s4, %s631
      %s633 = smul.u32 2, %s27
      %s634 = smul.u32 2, %s27
      %p635 = scmp.lt.s32.totalorder %s634, 1
      %s636 = scalar_select %p635, %s634, 1
      %s637 = smul.addr %s636, 8
      %s638 = scalar_lea.vmem %s5, %s637
      %s639 = smul.u32 2, %s27
      %s640 = smul.u32 2, %s27
      %p641 = scmp.lt.s32.totalorder %s640, 1
      %s642 = scalar_select %p641, %s640, 1
      %s643 = smul.addr %s642, 8
      %s644 = scalar_lea.vmem %s6, %s643
      %s645 = smul.u32 2, %s27
      %s646 = smul.u32 2, %s27
      %p647 = scmp.lt.s32.totalorder %s646, 1
      %s648 = scalar_select %p647, %s646, 1
      %s649 = smul.addr %s648, 8
      %s650 = scalar_lea.vmem %s7, %s649
      %s651 = smul.u32 2, %s27
      %s652 = smul.u32 2, %s27
      %p653 = scmp.lt.s32.totalorder %s28, 1
      %s654 = scalar_select %p653, %s28, 1
      %p655 = scmp.lt.s32.totalorder %s652, 1
      %s656 = scalar_select %p655, %s652, 1
      %s657 = smul.addr %s654, 2
      %s658 = sadd.s32 %s656, %s657
      %s659 = smul.addr %s658, 8
      %s660 = scalar_lea.vmem %s8, %s659
      %s661 = smul.u32 2, %s27
      %s662 = smul.u32 2, %s27
      %p663 = scmp.lt.s32.totalorder %s28, 1
      %s664 = scalar_select %p663, %s28, 1
      %p665 = scmp.lt.s32.totalorder %s662, 1
      %s666 = scalar_select %p665, %s662, 1
      %s667 = smul.addr %s664, 2
      %s668 = sadd.s32 %s666, %s667
      %s669 = smul.addr %s668, 8
      %s670 = scalar_lea.vmem %s9, %s669
      %s671 = smul.u32 2, %s27
      %s672 = smul.u32 2, %s27
      %p673 = scmp.lt.s32.totalorder %s28, 1
      %s674 = scalar_select %p673, %s28, 1
      %p675 = scmp.lt.s32.totalorder %s672, 1
      %s676 = scalar_select %p675, %s672, 1
      %s677 = smul.addr %s674, 2
      %s678 = sadd.s32 %s676, %s677
      %s679 = smul.addr %s678, 8
      %s680 = scalar_lea.vmem %s10, %s679
      %s681 = smul.u32 2, %s27
      %s682 = smul.u32 2, %s27
      %p683 = scmp.lt.s32.totalorder %s28, 1
      %s684 = scalar_select %p683, %s28, 1
      %p685 = scmp.lt.s32.totalorder %s682, 1
      %s686 = scalar_select %p685, %s682, 1
      %s687 = smul.addr %s684, 2
      %s688 = sadd.s32 %s686, %s687
      %s689 = smul.addr %s688, 8
      %s690 = scalar_lea.vmem %s11, %s689
      %s691 = smul.u32 2, %s27
      %v692 = vld [vmem:[%s596] sm:$0xff]
      %v693 = vld [vmem:[%s596 + $0x8] sm:$0xff]
      %v694 = vld [vmem:[%s606] sm:$0xff]
      %v695 = vld [vmem:[%s606 + $0x8] sm:$0xff]
      %v696 = vld [vmem:[%s632] sm:$0xff]
      %v697 = vld [vmem:[%s632 + $0x8] sm:$0xff]
      %v698 = vld [vmem:[%s638] sm:$0xff]
      %v699 = vld [vmem:[%s638 + $0x8] sm:$0xff]
      %v700 = vmul.f32 %v692, %v696
      %v701 = vmul.f32 %v693, %v697
      %v702 = vmul.f32 %v694, %v698
      %v703 = vmul.f32 %v695, %v699
      %v704 = vsub.f32 %v700, %v702
      %v705 = vsub.f32 %v701, %v703
      %706 = vst [vmem:[%s660] sm:$0xff] %v704
      %707 = vst [vmem:[%s660 + $0x8] sm:$0xff] %v705
      %v708 = vmul.f32 %v692, %v698
      %v709 = vmul.f32 %v693, %v699
      %v710 = vmul.f32 %v694, %v696
      %v711 = vmul.f32 %v695, %v697
      %v712 = vadd.f32 %v708, %v710
      %v713 = vadd.f32 %v709, %v711
      %714 = vst [vmem:[%s670] sm:$0xff] %v712
      %715 = vst [vmem:[%s670 + $0x8] sm:$0xff] %v713
      %v716 = vld [vmem:[%s616] sm:$0xff]
      %v717 = vld [vmem:[%s616 + $0x8] sm:$0xff]
      %v718 = vld [vmem:[%s626] sm:$0xff]
      %v719 = vld [vmem:[%s626 + $0x8] sm:$0xff]
      %v720 = vld [vmem:[%s644] sm:$0xff]
      %v721 = vld [vmem:[%s644 + $0x8] sm:$0xff]
      %v722 = vld [vmem:[%s650] sm:$0xff]
      %v723 = vld [vmem:[%s650 + $0x8] sm:$0xff]
      %v724 = vmul.f32 %v716, %v720
      %v725 = vmul.f32 %v717, %v721
      %v726 = vmul.f32 %v718, %v722
      %v727 = vmul.f32 %v719, %v723
      %v728 = vsub.f32 %v724, %v726
      %v729 = vsub.f32 %v725, %v727
      %730 = vst [vmem:[%s680] sm:$0xff] %v728
      %731 = vst [vmem:[%s680 + $0x8] sm:$0xff] %v729
      %v732 = vmul.f32 %v716, %v722
      %v733 = vmul.f32 %v717, %v723
      %v734 = vmul.f32 %v718, %v720
      %v735 = vmul.f32 %v719, %v721
      %v736 = vadd.f32 %v732, %v734
      %v737 = vadd.f32 %v733, %v735
      %738 = vst [vmem:[%s690] sm:$0xff] %v736
      %739 = vst [vmem:[%s690 + $0x8] sm:$0xff] %v737
      %s740 = smul.u32 2, %s27
      %p741 = scmp.lt.s32.totalorder %s28, 1
      %s742 = scalar_select %p741, %s28, 1
      %p743 = scmp.lt.s32.totalorder %s740, 1
      %s744 = scalar_select %p743, %s740, 1
      %s745 = smul.addr %s742, 2
      %s746 = sadd.s32 %s744, %s745
      %s747 = smul.addr %s746, 8
      %s748 = scalar_lea.vmem %s8, %s747
      %s749 = smul.u32 2, %s27
      %p750 = scmp.lt.s32.totalorder %s28, 1
      %s751 = scalar_select %p750, %s28, 1
      %p752 = scmp.lt.s32.totalorder %s749, 1
      %s753 = scalar_select %p752, %s749, 1
      %s754 = smul.addr %s751, 2
      %s755 = sadd.s32 %s753, %s754
      %s756 = smul.addr %s755, 8
      %s757 = scalar_lea.vmem %s9, %s756
      %s758 = smul.u32 2, %s27
      %p759 = scmp.lt.s32.totalorder %s28, 1
      %s760 = scalar_select %p759, %s28, 1
      %p761 = scmp.lt.s32.totalorder %s758, 1
      %s762 = scalar_select %p761, %s758, 1
      %s763 = smul.addr %s760, 2
      %s764 = sadd.s32 %s762, %s763
      %s765 = smul.addr %s764, 8
      %s766 = scalar_lea.vmem %s10, %s765
      %s767 = smul.u32 2, %s27
      %p768 = scmp.lt.s32.totalorder %s28, 1
      %s769 = scalar_select %p768, %s28, 1
      %p770 = scmp.lt.s32.totalorder %s767, 1
      %s771 = scalar_select %p770, %s767, 1
      %s772 = smul.addr %s769, 2
      %s773 = sadd.s32 %s771, %s772
      %s774 = smul.addr %s773, 8
      %s775 = scalar_lea.vmem %s11, %s774
      // Predicated region
      $region53: #{a_call__.5} parent=51 // pred_check
        %p776 = pneg %p271
      $region54: #{a_call__.5} parent=51 // pred_check_branch
        %778 = sbr.rel (%p776) target = $region56
      $region55: #{a_call__.5} parent=51 // pred_region
        %s779 = smul.u32 2, %s27
      $region56: #{a_call__.5} parent=51 // pred_fallthru
        _
      // Predicated region
      $region57: #{a_call__.5} parent=51 // pred_check
        %p780 = pneg %p299
      $region58: #{a_call__.5} parent=51 // pred_check_branch
        %782 = sbr.rel (%p780) target = $region60
      $region59: #{a_call__.5} parent=51 // pred_region
        %s783 = smul.u32 2, %s27
      $region60: #{a_call__.5} parent=51 // pred_fallthru
        _
      // Predicated region
      $region61: #{a_call__.5} parent=51 // pred_check
        %p784 = pneg %p327
      $region62: #{a_call__.5} parent=51 // pred_check_branch
        %786 = sbr.rel (%p784) target = $region64
      $region63: #{a_call__.5} parent=51 // pred_region
        %s787 = smul.u32 2, %s27
      $region64: #{a_call__.5} parent=51 // pred_fallthru
        _
      // Predicated region
      $region65: #{a_call__.5} parent=51 // pred_check
        %p788 = pneg %p355
      $region66: #{a_call__.5} parent=51 // pred_check_branch
        %790 = sbr.rel (%p788) target = $region68
      $region67: #{a_call__.5} parent=51 // pred_region
        %s791 = smul.u32 2, %s27
      $region68: #{a_call__.5} parent=51 // pred_fallthru
        _
    $region52: #{a_call__.5} parent=5 // pred_fallthru
      _
    %p792 = scmp.le.s32.totalorder 2, %s18
    // Predicated region
    $region69: #{a_call__.5} parent=5 // pred_check
      %p793 = pneg %p792
    $region70: #{a_call__.5} parent=5 // pred_check_branch
      %795 = sbr.rel (%p793) target = $region72
    $region71: #{a_call__.5} parent=5 // pred_region
      %s796 = ssub.s32 %s18, 2
      // Predicated region
      $region73: #{a_call__.5} parent=71 // pred_check
        %p797 = pneg %p277
      $region74: #{a_call__.5} parent=71 // pred_check_branch
        %799 = sbr.rel (%p797) target = $region76
      $region75: #{a_call__.5} parent=71 // pred_region
        %s800 = smul.u32 2, %s29
        %p801 = scmp.lt.s32.totalorder %s30, 1
        %s802 = scalar_select %p801, %s30, 1
        %p803 = scmp.lt.s32.totalorder %s800, 1
        %s804 = scalar_select %p803, %s800, 1
        %s805 = smul.addr %s802, 2
        %s806 = sadd.s32 %s804, %s805
        %s807 = smul.addr %s806, 8
        %s808 = scalar_lea.vmem %s8, %s807
      $region76: #{a_call__.5} parent=71 // pred_fallthru
        _
      // Predicated region
      $region77: #{a_call__.5} parent=71 // pred_check
        %p809 = pneg %p305
      $region78: #{a_call__.5} parent=71 // pred_check_branch
        %811 = sbr.rel (%p809) target = $region80
      $region79: #{a_call__.5} parent=71 // pred_region
        %s812 = smul.u32 2, %s29
        %p813 = scmp.lt.s32.totalorder %s30, 1
        %s814 = scalar_select %p813, %s30, 1
        %p815 = scmp.lt.s32.totalorder %s812, 1
        %s816 = scalar_select %p815, %s812, 1
        %s817 = smul.addr %s814, 2
        %s818 = sadd.s32 %s816, %s817
        %s819 = smul.addr %s818, 8
        %s820 = scalar_lea.vmem %s9, %s819
      $region80: #{a_call__.5} parent=71 // pred_fallthru
        _
      // Predicated region
      $region81: #{a_call__.5} parent=71 // pred_check
        %p821 = pneg %p333
      $region82: #{a_call__.5} parent=71 // pred_check_branch
        %823 = sbr.rel (%p821) target = $region84
      $region83: #{a_call__.5} parent=71 // pred_region
        %s824 = smul.u32 2, %s29
        %p825 = scmp.lt.s32.totalorder %s30, 1
        %s826 = scalar_select %p825, %s30, 1
        %p827 = scmp.lt.s32.totalorder %s824, 1
        %s828 = scalar_select %p827, %s824, 1
        %s829 = smul.addr %s826, 2
        %s830 = sadd.s32 %s828, %s829
        %s831 = smul.addr %s830, 8
        %s832 = scalar_lea.vmem %s10, %s831
      $region84: #{a_call__.5} parent=71 // pred_fallthru
        _
      // Predicated region
      $region85: #{a_call__.5} parent=71 // pred_check
        %p833 = pneg %p361
      $region86: #{a_call__.5} parent=71 // pred_check_branch
        %835 = sbr.rel (%p833) target = $region88
      $region87: #{a_call__.5} parent=71 // pred_region
        %s836 = smul.u32 2, %s29
        %p837 = scmp.lt.s32.totalorder %s30, 1
        %s838 = scalar_select %p837, %s30, 1
        %p839 = scmp.lt.s32.totalorder %s836, 1
        %s840 = scalar_select %p839, %s836, 1
        %s841 = smul.addr %s838, 2
        %s842 = sadd.s32 %s840, %s841
        %s843 = smul.addr %s842, 8
        %s844 = scalar_lea.vmem %s11, %s843
      $region88: #{a_call__.5} parent=71 // pred_fallthru
        _
    $region72: #{a_call__.5} parent=5 // pred_fallthru
      _
  $region6: #{a_call__.5} parent=0 // loop_footer
    %s22 = sadd.s32 1, %s18
  $region7: #{a_call__.5} parent=0 // loop_footer_branch
    %17 = sbr.rel target = $region3
  $region8: #{a_call__.5} parent=0 // loop_exit
    _

</llo_original>
